<compile_context>
chip_gen: v5e
topology: v5e:2x2
jax: 0.10.0
libtpu: 0.0.40
codegen_flags: <defaults>
</compile_context>

<pallas_src>
import functools

import jax
import jax.numpy as jnp
from jax import lax
from jax.experimental import pallas as pl
from jax.experimental.pallas import tpu as pltpu


# ----------------------------------------------------------------------------
# In-kernel helpers
# ----------------------------------------------------------------------------
def _ln(x, g, b, eps):
    """LayerNorm over the last dim.  x: (I, D); g, b: (1, D).  All f32."""
    mu = jnp.mean(x, axis=-1, keepdims=True)
    xc = x - mu
    var = jnp.mean(xc * xc, axis=-1, keepdims=True)
    return xc * lax.rsqrt(var + eps) * g + b


# ----------------------------------------------------------------------------
# The single fused kernel: embed -> depth x block -> final LN (+ proj)
# ----------------------------------------------------------------------------
def _fused_kernel(*refs, n_head, eps, has_in_proj, has_out_proj):
    refs = list(refs)
    idx = 0

    def take():
        nonlocal idx
        r = refs[idx]
        idx += 1
        return r

    x_ref = take()
    w_in_ref = take() if has_in_proj else None
    pos_ref = take()
    mask_ref = take()
    ln1g = take(); ln1b = take()
    wqkv = take(); bqkv = take()
    wop = take(); bop = take()
    ln2g = take(); ln2b = take()
    wfc = take(); bfc = take()
    wmp = take(); bmp = take()
    lnfg = take(); lnfb = take()
    w_out_ref = take() if has_out_proj else None
    o_ref = take()
    res_ref = take()          # VMEM scratch: residual stream (I, E) f32

    d = pl.program_id(1)
    n_depth = pl.num_programs(1)

    # ---- embedding: idea_proj + positional embedding (first layer only) ----
    @pl.when(d == 0)
    def _():
        xin = x_ref[0]                                        # (I, Din) f32
        if has_in_proj:
            emb = jnp.dot(xin.astype(jnp.bfloat16), w_in_ref[...],
                          preferred_element_type=jnp.float32)
        else:
            emb = xin.astype(jnp.float32)
        res_ref[...] = emb + pos_ref[...]

    x = res_ref[...]                                          # (I, E) f32
    seq, emb_dim = x.shape
    hd = emb_dim // n_head

    # ---- attention branch (scale already folded into Q weights) -----------
    h = _ln(x, ln1g[0], ln1b[0], eps)
    qkv = (jnp.dot(h.astype(jnp.bfloat16), wqkv[0],
                   preferred_element_type=jnp.float32) + bqkv[0])   # (I, 3E)

    # Head split (static lane slices stacked on a new leading head axis);
    # all heavy math below is batched over heads in one einsum per step.
    q = jnp.stack([qkv[:, hh * hd:(hh + 1) * hd]
                   for hh in range(n_head)], axis=0).astype(jnp.bfloat16)
    k = jnp.stack([qkv[:, emb_dim + hh * hd: emb_dim + (hh + 1) * hd]
                   for hh in range(n_head)], axis=0).astype(jnp.bfloat16)
    v = jnp.stack([qkv[:, 2 * emb_dim + hh * hd: 2 * emb_dim + (hh + 1) * hd]
                   for hh in range(n_head)], axis=0).astype(jnp.bfloat16)

    s = jnp.einsum('hqd,hkd->hqk', q, k,
                   preferred_element_type=jnp.float32)        # (H, I, I) f32
    s = s + mask_ref[...]                                     # additive bias
    m = jnp.max(s, axis=-1, keepdims=True)
    p = jnp.exp(s - m)
    p = p * pl.reciprocal(jnp.sum(p, axis=-1, keepdims=True), approx=True)
    ctx = jnp.einsum('hqk,hkd->hqd', p.astype(jnp.bfloat16), v,
                     preferred_element_type=jnp.float32)      # (H, I, hd)
    attn = jnp.concatenate([ctx[hh] for hh in range(n_head)], axis=-1)
    attn = (jnp.dot(attn.astype(jnp.bfloat16), wop[0],
                    preferred_element_type=jnp.float32) + bop[0])
    x = x + attn

    # ---- MLP branch --------------------------------------------------------
    h2 = _ln(x, ln2g[0], ln2b[0], eps)
    h2 = (jnp.dot(h2.astype(jnp.bfloat16), wfc[0],
                  preferred_element_type=jnp.float32) + bfc[0])
    h2 = jax.nn.gelu(h2, approximate=True)
    h2 = (jnp.dot(h2.astype(jnp.bfloat16), wmp[0],
                  preferred_element_type=jnp.float32) + bmp[0])
    res_ref[...] = x + h2

    # ---- final LayerNorm + predictor_proj (last layer only) ---------------
    @pl.when(d == n_depth - 1)
    def _():
        hf = _ln(res_ref[...], lnfg[...], lnfb[...], eps)
        if has_out_proj:
            o_ref[0] = jnp.dot(hf.astype(jnp.bfloat16), w_out_ref[...],
                               preferred_element_type=jnp.float32
                               ).astype(o_ref.dtype)
        else:
            o_ref[0] = hf.astype(o_ref.dtype)


# ----------------------------------------------------------------------------
# Wrapper: pack params (stack over depth, bf16 weights, fold softmax scale)
# ----------------------------------------------------------------------------
def _pack_params(params, n_head):
    blocks = params["blocks"]
    depth = len(blocks)
    E = blocks[0]["ln1_g"].shape[0]
    hidden = blocks[0]["fc_w"].shape[1]
    scale = 1.0 / float(E // n_head) ** 0.5

    def stack(key):
        return jnp.stack([b[key] for b in blocks], axis=0)

    attn_w = stack("attn_w")                       # (depth, E, 3E) f32
    attn_b = stack("attn_b")                       # (depth, 3E)   f32
    # Fold 1/sqrt(head_dim) into the Q columns (free at runtime).
    attn_w = attn_w.at[:, :, :E].multiply(scale)
    attn_b = attn_b.at[:, :E].multiply(scale)

    packed = {
        "ln1_g": stack("ln1_g").reshape(depth, 1, E),
        "ln1_b": stack("ln1_b").reshape(depth, 1, E),
        "attn_w": attn_w.astype(jnp.bfloat16),
        "attn_b": attn_b.reshape(depth, 1, 3 * E),
        "attn_proj_w": stack("attn_proj_w").astype(jnp.bfloat16),
        "attn_proj_b": stack("attn_proj_b").reshape(depth, 1, E),
        "ln2_g": stack("ln2_g").reshape(depth, 1, E),
        "ln2_b": stack("ln2_b").reshape(depth, 1, E),
        "fc_w": stack("fc_w").astype(jnp.bfloat16),
        "fc_b": stack("fc_b").reshape(depth, 1, hidden),
        "mlp_proj_w": stack("mlp_proj_w").astype(jnp.bfloat16),
        "mlp_proj_b": stack("mlp_proj_b").reshape(depth, 1, E),
    }
    return packed, depth, E, hidden


def _const_spec(shape):
    n = len(shape)
    return pl.BlockSpec(shape, lambda b, d, _n=n: (0,) * _n)


def _depth_spec(shape):
    n = len(shape)
    return pl.BlockSpec(shape, lambda b, d, _n=n: (d,) + (0,) * (_n - 1))


def idea_predictor_forward(idea_vecs, params, *, n_head, eps=1e-5):
    """(B, I, Din) -> (B, I, Din): idea_proj + wpe, depth blocks, ln_f, proj."""
    B, I, Din = idea_vecs.shape
    packed, depth, E, hidden = _pack_params(params, n_head)

    pos = params["wpe"][:I].astype(jnp.float32)                     # (I, E)
    row = lax.broadcasted_iota(jnp.int32, (I, I), 0)
    col = lax.broadcasted_iota(jnp.int32, (I, I), 1)
    mask = jnp.where(col <= row, 0.0, -1e30).astype(jnp.float32)    # additive

    w_in = params.get("idea_proj_w")
    w_out = params.get("predictor_proj_w")
    has_in = w_in is not None
    has_out = w_out is not None
    Dout = w_out.shape[1] if has_out else E

    kern = functools.partial(_fused_kernel, n_head=n_head, eps=eps,
                             has_in_proj=has_in, has_out_proj=has_out)

    in_specs = [pl.BlockSpec((1, I, Din), lambda b, d: (b, 0, 0))]
    args = [idea_vecs.astype(jnp.float32)]
    if has_in:
        in_specs.append(_const_spec((Din, E)))
        args.append(w_in.astype(jnp.bfloat16))
    in_specs += [_const_spec((I, E)), _const_spec((I, I))]
    args += [pos, mask]

    depth_layout = [
        ("ln1_g", (1, 1, E)), ("ln1_b", (1, 1, E)),
        ("attn_w", (1, E, 3 * E)), ("attn_b", (1, 1, 3 * E)),
        ("attn_proj_w", (1, E, E)), ("attn_proj_b", (1, 1, E)),
        ("ln2_g", (1, 1, E)), ("ln2_b", (1, 1, E)),
        ("fc_w", (1, E, hidden)), ("fc_b", (1, 1, hidden)),
        ("mlp_proj_w", (1, hidden, E)), ("mlp_proj_b", (1, 1, E)),
    ]
    for name, blk in depth_layout:
        in_specs.append(_depth_spec(blk))
        args.append(packed[name])

    in_specs += [_const_spec((1, E)), _const_spec((1, E))]
    args += [params["ln_f_g"].reshape(1, E), params["ln_f_b"].reshape(1, E)]
    if has_out:
        in_specs.append(_const_spec((E, Dout)))
        args.append(w_out.astype(jnp.bfloat16))

    return pl.pallas_call(
        kern,
        out_shape=jax.ShapeDtypeStruct((B, I, Dout), jnp.float32),
        grid=(B, depth),
        in_specs=in_specs,
        out_specs=pl.BlockSpec((1, I, Dout), lambda b, d: (b, 0, 0)),
        scratch_shapes=[pltpu.VMEM((I, E), jnp.float32)],
        compiler_params=pltpu.CompilerParams(
            dimension_semantics=("parallel", "arbitrary"),
            vmem_limit_bytes=48 * 1024 * 1024),
    )(*args)


# ----------------------------------------------------------------------------
# Parameter init (mirrors the PyTorch _init_weights) + pure-JAX reference
# ----------------------------------------------------------------------------
def init_params(key, *, block_size, input_dim, embed_dim, depth, n_head,
                mlp_ratio):
    del n_head
    hidden = int(mlp_ratio * embed_dim)
    std = 0.02
    std_scaled = std * (2 * depth) ** (-0.5)
    keys = jax.random.split(key, 4 + depth)
    params = {}
    if embed_dim != input_dim:
        params["idea_proj_w"] = std_scaled * jax.random.normal(
            keys[0], (input_dim, embed_dim), jnp.float32)
        params["predictor_proj_w"] = std_scaled * jax.random.normal(
            keys[1], (embed_dim, input_dim), jnp.float32)
    params["wpe"] = std * jax.random.normal(
        keys[2], (block_size + 1, embed_dim), jnp.float32)
    params["ln_f_g"] = jnp.ones((embed_dim,), jnp.float32)
    params["ln_f_b"] = jnp.zeros((embed_dim,), jnp.float32)

    blocks = []
    for d in range(depth):
        bk = jax.random.split(keys[4 + d], 4)
        blocks.append({
            "ln1_g": jnp.ones((embed_dim,), jnp.float32),
            "ln1_b": jnp.zeros((embed_dim,), jnp.float32),
            "attn_w": std * jax.random.normal(
                bk[0], (embed_dim, 3 * embed_dim), jnp.float32),
            "attn_b": jnp.zeros((3 * embed_dim,), jnp.float32),
            "attn_proj_w": std_scaled * jax.random.normal(
                bk[1], (embed_dim, embed_dim), jnp.float32),
            "attn_proj_b": jnp.zeros((embed_dim,), jnp.float32),
            "ln2_g": jnp.ones((embed_dim,), jnp.float32),
            "ln2_b": jnp.zeros((embed_dim,), jnp.float32),
            "fc_w": std * jax.random.normal(
                bk[2], (embed_dim, hidden), jnp.float32),
            "fc_b": jnp.zeros((hidden,), jnp.float32),
            "mlp_proj_w": std_scaled * jax.random.normal(
                bk[3], (hidden, embed_dim), jnp.float32),
            "mlp_proj_b": jnp.zeros((embed_dim,), jnp.float32),
        })
    params["blocks"] = blocks
    return params


def _ref_ln(x, g, b, eps):
    mu = x.mean(-1, keepdims=True)
    var = ((x - mu) ** 2).mean(-1, keepdims=True)
    return (x - mu) * lax.rsqrt(var + eps) * g + b


def reference_forward(idea_vecs, params, *, n_head, eps=1e-5):
    """Pure-JAX f32 reference of the same forward pass."""
    B, I, Din = idea_vecs.shape
    w_in = params.get("idea_proj_w")
    x = idea_vecs @ w_in if w_in is not None else idea_vecs
    x = x + params["wpe"][:I]
    E = x.shape[-1]
    hd = E // n_head
    mask = jnp.tril(jnp.ones((I, I), bool))
    for bp in params["blocks"]:
        h = _ref_ln(x, bp["ln1_g"], bp["ln1_b"], eps)
        qkv = h @ bp["attn_w"] + bp["attn_b"]
        q, k, v = jnp.split(qkv, 3, axis=-1)
        q = q.reshape(B, I, n_head, hd).transpose(0, 2, 1, 3)
        k = k.reshape(B, I, n_head, hd).transpose(0, 2, 1, 3)
        v = v.reshape(B, I, n_head, hd).transpose(0, 2, 1, 3)
        s = jnp.einsum('bhqd,bhkd->bhqk', q, k) / (hd ** 0.5)
        s = jnp.where(mask, s, -jnp.inf)
        p = jax.nn.softmax(s, axis=-1)
        ctx = jnp.einsum('bhqk,bhkd->bhqd', p, v)
        ctx = ctx.transpose(0, 2, 1, 3).reshape(B, I, E)
        x = x + ctx @ bp["attn_proj_w"] + bp["attn_proj_b"]
        h2 = _ref_ln(x, bp["ln2_g"], bp["ln2_b"], eps)
        h2 = jax.nn.gelu(h2 @ bp["fc_w"] + bp["fc_b"], approximate=True)
        x = x + h2 @ bp["mlp_proj_w"] + bp["mlp_proj_b"]
    x = _ref_ln(x, params["ln_f_g"], params["ln_f_b"], eps)
    w_out = params.get("predictor_proj_w")
    return x @ w_out if w_out is not None else x


# ----------------------------------------------------------------------------
if __name__ == "__main__":
    # Small, lane-dense demo shapes: B=2, I=8 ideas, input_dim=256,
    # predictor_embed_dim=128, depth=2, heads=4 (head_dim=32), mlp_ratio=4.
    B, I = 2, 8
    cfg = dict(block_size=8, input_dim=256, embed_dim=128, depth=2,
               n_head=4, mlp_ratio=4.0)

    key = jax.random.PRNGKey(0)
    pkey, xkey = jax.random.split(key)
    params = init_params(
        pkey,
        block_size=cfg["block_size"],
        input_dim=cfg["input_dim"],
        embed_dim=cfg["embed_dim"],
        depth=cfg["depth"],
        n_head=cfg["n_head"],
        mlp_ratio=cfg["mlp_ratio"],
    )
    idea_vecs = jax.random.normal(xkey, (B, I, cfg["input_dim"]), jnp.float32)

    fwd = jax.jit(functools.partial(idea_predictor_forward,
                                    n_head=cfg["n_head"]))
    out = jax.block_until_ready(fwd(idea_vecs, params))

    ref = jax.block_until_ready(
        reference_forward(idea_vecs, params, n_head=cfg["n_head"]))

    assert out.shape == (B, I, cfg["input_dim"])
    assert bool(jnp.all(jnp.isfinite(out)))
    err = float(jnp.max(jnp.abs(out - ref)))
    assert err < 3e-2, f"kernel vs reference max abs err {err}"
    print("KERNEL_OK")
</pallas_src>

<mosaic_0001>
module attributes {stable_mosaic.version = 11 : i64} {
  func.func @_fused_kernel(%arg0: i32, %arg1: i32, %arg2: memref<1x8x256xf32, #tpu.memory_space<vmem>>, %arg3: memref<256x128xbf16, #tpu.memory_space<vmem>>, %arg4: memref<8x128xf32, #tpu.memory_space<vmem>>, %arg5: memref<8x8xf32, #tpu.memory_space<vmem>>, %arg6: memref<1x1x128xf32, #tpu.memory_space<vmem>>, %arg7: memref<1x1x128xf32, #tpu.memory_space<vmem>>, %arg8: memref<1x128x384xbf16, #tpu.memory_space<vmem>>, %arg9: memref<1x1x384xf32, #tpu.memory_space<vmem>>, %arg10: memref<1x128x128xbf16, #tpu.memory_space<vmem>>, %arg11: memref<1x1x128xf32, #tpu.memory_space<vmem>>, %arg12: memref<1x1x128xf32, #tpu.memory_space<vmem>>, %arg13: memref<1x1x128xf32, #tpu.memory_space<vmem>>, %arg14: memref<1x128x512xbf16, #tpu.memory_space<vmem>>, %arg15: memref<1x1x512xf32, #tpu.memory_space<vmem>>, %arg16: memref<1x512x128xbf16, #tpu.memory_space<vmem>>, %arg17: memref<1x1x128xf32, #tpu.memory_space<vmem>>, %arg18: memref<1x128xf32, #tpu.memory_space<vmem>>, %arg19: memref<1x128xf32, #tpu.memory_space<vmem>>, %arg20: memref<128x256xbf16, #tpu.memory_space<vmem>>, %arg21: memref<1x8x256xf32, #tpu.memory_space<vmem>>, %arg22: memref<8x128xf32, #tpu.memory_space<vmem>>) attributes {dimension_semantics = [#tpu.dimension_semantics<parallel>, #tpu.dimension_semantics<arbitrary>], iteration_bounds = array<i64: 2, 2>, scalar_prefetch = 0 : i64, scratch_operands = 1 : i64, tpu.core_type = #tpu.core_type<tc>, window_params = [{transform_indices = @transform_0, window_bounds = array<i64: 1, 8, 256>}, {pipeline_mode = #tpu.pipeline_mode<synchronous>, transform_indices = @transform_1, window_bounds = array<i64: 256, 128>}, {pipeline_mode = #tpu.pipeline_mode<synchronous>, transform_indices = @transform_2, window_bounds = array<i64: 8, 128>}, {pipeline_mode = #tpu.pipeline_mode<synchronous>, transform_indices = @transform_3, window_bounds = array<i64: 8, 8>}, {transform_indices = @transform_4, window_bounds = array<i64: 1, 1, 128>}, {transform_indices = @transform_5, window_bounds = array<i64: 1, 1, 128>}, {transform_indices = @transform_6, window_bounds = array<i64: 1, 128, 384>}, {transform_indices = @transform_7, window_bounds = array<i64: 1, 1, 384>}, {transform_indices = @transform_8, window_bounds = array<i64: 1, 128, 128>}, {transform_indices = @transform_9, window_bounds = array<i64: 1, 1, 128>}, {transform_indices = @transform_10, window_bounds = array<i64: 1, 1, 128>}, {transform_indices = @transform_11, window_bounds = array<i64: 1, 1, 128>}, {transform_indices = @transform_12, window_bounds = array<i64: 1, 128, 512>}, {transform_indices = @transform_13, window_bounds = array<i64: 1, 1, 512>}, {transform_indices = @transform_14, window_bounds = array<i64: 1, 512, 128>}, {transform_indices = @transform_15, window_bounds = array<i64: 1, 1, 128>}, {pipeline_mode = #tpu.pipeline_mode<synchronous>, transform_indices = @transform_16, window_bounds = array<i64: 1, 128>}, {pipeline_mode = #tpu.pipeline_mode<synchronous>, transform_indices = @transform_17, window_bounds = array<i64: 1, 128>}, {pipeline_mode = #tpu.pipeline_mode<synchronous>, transform_indices = @transform_18, window_bounds = array<i64: 128, 256>}, {transform_indices = @transform_19, window_bounds = array<i64: 1, 8, 256>}]} {
    %c0_i32 = arith.constant 0 : i32
    %0 = arith.cmpi eq, %arg1, %c0_i32 : i32
    %1 = arith.extui %0 : i1 to i32
    %c0_i32_0 = arith.constant 0 : i32
    %2 = arith.cmpi ne, %1, %c0_i32_0 : i32
    scf.if %2 {
      %c0_64 = arith.constant 0 : index
      %c0_65 = arith.constant 0 : index
      %c0_66 = arith.constant 0 : index
      %159 = vector.load %arg2[%c0_64, %c0_65, %c0_66] : memref<1x8x256xf32, #tpu.memory_space<vmem>>, vector<1x8x256xf32>
      %160 = vector.shape_cast %159 : vector<1x8x256xf32> to vector<8x256xf32>
      %161 = arith.truncf %160 : vector<8x256xf32> to vector<8x256xbf16>
      %c0_67 = arith.constant 0 : index
      %c0_68 = arith.constant 0 : index
      %162 = vector.load %arg3[%c0_67, %c0_68] : memref<256x128xbf16, #tpu.memory_space<vmem>>, vector<256x128xbf16>
      %cst_69 = arith.constant dense<0.000000e+00> : vector<8x128xf32>
      %163 = tpu.matmul %161, %162, %cst_69 {dimension_numbers = #tpu.dot_dimension_numbers<[1], [0], [0], [1], [0, 0, 1, 1], [], []>} : vector<8x256xbf16>, vector<256x128xbf16>, vector<8x128xf32> -> vector<8x128xf32>
      %c0_70 = arith.constant 0 : index
      %c0_71 = arith.constant 0 : index
      %164 = vector.load %arg4[%c0_70, %c0_71] : memref<8x128xf32, #tpu.memory_space<vmem>>, vector<8x128xf32>
      %165 = arith.addf %163, %164 : vector<8x128xf32>
      %c0_72 = arith.constant 0 : index
      %c0_73 = arith.constant 0 : index
      %166 = vector.load %arg22[%c0_72, %c0_73] : memref<8x128xf32, #tpu.memory_space<vmem>>, vector<8x128xf32>
      tpu.vector_store %arg22[%c0_72, %c0_73], %165 {strides = array<i32>} : memref<8x128xf32, #tpu.memory_space<vmem>>, vector<8x128xf32>,
    } else {
    }
    %c0 = arith.constant 0 : index
    %c0_1 = arith.constant 0 : index
    %3 = vector.load %arg22[%c0, %c0_1] : memref<8x128xf32, #tpu.memory_space<vmem>>, vector<8x128xf32>
    %c0_2 = arith.constant 0 : index
    %c0_3 = arith.constant 0 : index
    %c0_4 = arith.constant 0 : index
    %4 = vector.load %arg6[%c0_2, %c0_3, %c0_4] : memref<1x1x128xf32, #tpu.memory_space<vmem>>, vector<1x1x128xf32>
    %5 = vector.shape_cast %4 : vector<1x1x128xf32> to vector<1x128xf32>
    %c0_5 = arith.constant 0 : index
    %c0_6 = arith.constant 0 : index
    %c0_7 = arith.constant 0 : index
    %6 = vector.load %arg7[%c0_5, %c0_6, %c0_7] : memref<1x1x128xf32, #tpu.memory_space<vmem>>, vector<1x1x128xf32>
    %7 = vector.shape_cast %6 : vector<1x1x128xf32> to vector<1x128xf32>
    %cst = arith.constant dense<0.000000e+00> : vector<8xf32>
    %8 = vector.multi_reduction <add>, %3, %cst [1] : vector<8x128xf32> to vector<8xf32>
    %9 = vector.shape_cast %8 : vector<8xf32> to vector<8x1xf32>
    %cst_8 = arith.constant 1.280000e+02 : f32
    %10 = vector.broadcast %cst_8 : f32 to vector<8x1xf32>
    %11 = arith.divf %9, %10 : vector<8x1xf32>
    %12 = vector.broadcast %11 : vector<8x1xf32> to vector<8x128xf32>
    %13 = arith.subf %3, %12 : vector<8x128xf32>
    %14 = arith.mulf %13, %13 : vector<8x128xf32>
    %cst_9 = arith.constant dense<0.000000e+00> : vector<8xf32>
    %15 = vector.multi_reduction <add>, %14, %cst_9 [1] : vector<8x128xf32> to vector<8xf32>
    %16 = vector.shape_cast %15 : vector<8xf32> to vector<8x1xf32>
    %cst_10 = arith.constant 1.280000e+02 : f32
    %17 = vector.broadcast %cst_10 : f32 to vector<8x1xf32>
    %18 = arith.divf %16, %17 : vector<8x1xf32>
    %cst_11 = arith.constant 9.99999974E-6 : f32
    %19 = vector.broadcast %cst_11 : f32 to vector<8x1xf32>
    %20 = arith.addf %18, %19 : vector<8x1xf32>
    %21 = math.rsqrt %20 : vector<8x1xf32>
    %22 = vector.broadcast %21 : vector<8x1xf32> to vector<8x128xf32>
    %23 = arith.mulf %13, %22 : vector<8x128xf32>
    %24 = vector.broadcast %5 : vector<1x128xf32> to vector<8x128xf32>
    %25 = arith.mulf %23, %24 : vector<8x128xf32>
    %26 = vector.broadcast %7 : vector<1x128xf32> to vector<8x128xf32>
    %27 = arith.addf %25, %26 : vector<8x128xf32>
    %28 = arith.truncf %27 : vector<8x128xf32> to vector<8x128xbf16>
    %c0_12 = arith.constant 0 : index
    %c0_13 = arith.constant 0 : index
    %c0_14 = arith.constant 0 : index
    %29 = vector.load %arg8[%c0_12, %c0_13, %c0_14] : memref<1x128x384xbf16, #tpu.memory_space<vmem>>, vector<1x128x384xbf16>
    %30 = vector.shape_cast %29 : vector<1x128x384xbf16> to vector<128x384xbf16>
    %cst_15 = arith.constant dense<0.000000e+00> : vector<8x384xf32>
    %31 = tpu.matmul %28, %30, %cst_15 {dimension_numbers = #tpu.dot_dimension_numbers<[1], [0], [0], [1], [0, 0, 1, 1], [], []>} : vector<8x128xbf16>, vector<128x384xbf16>, vector<8x384xf32> -> vector<8x384xf32>
    %c0_16 = arith.constant 0 : index
    %c0_17 = arith.constant 0 : index
    %c0_18 = arith.constant 0 : index
    %32 = vector.load %arg9[%c0_16, %c0_17, %c0_18] : memref<1x1x384xf32, #tpu.memory_space<vmem>>, vector<1x1x384xf32>
    %33 = vector.shape_cast %32 : vector<1x1x384xf32> to vector<1x384xf32>
    %34 = vector.broadcast %33 : vector<1x384xf32> to vector<8x384xf32>
    %35 = arith.addf %31, %34 : vector<8x384xf32>
    %36 = vector.extract_strided_slice %35 {offsets = [0, 0], sizes = [8, 32], strides = [1, 1]} : vector<8x384xf32> to vector<8x32xf32>
    %37 = vector.extract_strided_slice %35 {offsets = [0, 32], sizes = [8, 32], strides = [1, 1]} : vector<8x384xf32> to vector<8x32xf32>
    %38 = vector.extract_strided_slice %35 {offsets = [0, 64], sizes = [8, 32], strides = [1, 1]} : vector<8x384xf32> to vector<8x32xf32>
    %39 = vector.extract_strided_slice %35 {offsets = [0, 96], sizes = [8, 32], strides = [1, 1]} : vector<8x384xf32> to vector<8x32xf32>
    %40 = vector.shape_cast %36 : vector<8x32xf32> to vector<1x8x32xf32>
    %41 = vector.shape_cast %37 : vector<8x32xf32> to vector<1x8x32xf32>
    %42 = vector.shape_cast %38 : vector<8x32xf32> to vector<1x8x32xf32>
    %43 = vector.shape_cast %39 : vector<8x32xf32> to vector<1x8x32xf32>
    %44 = tpu.concatenate %40, %41, %42, %43 in 0 : vector<1x8x32xf32>, vector<1x8x32xf32>, vector<1x8x32xf32>, vector<1x8x32xf32> -> vector<4x8x32xf32>
    %45 = arith.truncf %44 : vector<4x8x32xf32> to vector<4x8x32xbf16>
    %46 = vector.extract_strided_slice %35 {offsets = [0, 128], sizes = [8, 32], strides = [1, 1]} : vector<8x384xf32> to vector<8x32xf32>
    %47 = vector.extract_strided_slice %35 {offsets = [0, 160], sizes = [8, 32], strides = [1, 1]} : vector<8x384xf32> to vector<8x32xf32>
    %48 = vector.extract_strided_slice %35 {offsets = [0, 192], sizes = [8, 32], strides = [1, 1]} : vector<8x384xf32> to vector<8x32xf32>
    %49 = vector.extract_strided_slice %35 {offsets = [0, 224], sizes = [8, 32], strides = [1, 1]} : vector<8x384xf32> to vector<8x32xf32>
    %50 = vector.shape_cast %46 : vector<8x32xf32> to vector<1x8x32xf32>
    %51 = vector.shape_cast %47 : vector<8x32xf32> to vector<1x8x32xf32>
    %52 = vector.shape_cast %48 : vector<8x32xf32> to vector<1x8x32xf32>
    %53 = vector.shape_cast %49 : vector<8x32xf32> to vector<1x8x32xf32>
    %54 = tpu.concatenate %50, %51, %52, %53 in 0 : vector<1x8x32xf32>, vector<1x8x32xf32>, vector<1x8x32xf32>, vector<1x8x32xf32> -> vector<4x8x32xf32>
    %55 = arith.truncf %54 : vector<4x8x32xf32> to vector<4x8x32xbf16>
    %56 = vector.extract_strided_slice %35 {offsets = [0, 256], sizes = [8, 32], strides = [1, 1]} : vector<8x384xf32> to vector<8x32xf32>
    %57 = vector.extract_strided_slice %35 {offsets = [0, 288], sizes = [8, 32], strides = [1, 1]} : vector<8x384xf32> to vector<8x32xf32>
    %58 = vector.extract_strided_slice %35 {offsets = [0, 320], sizes = [8, 32], strides = [1, 1]} : vector<8x384xf32> to vector<8x32xf32>
    %59 = vector.extract_strided_slice %35 {offsets = [0, 352], sizes = [8, 32], strides = [1, 1]} : vector<8x384xf32> to vector<8x32xf32>
    %60 = vector.shape_cast %56 : vector<8x32xf32> to vector<1x8x32xf32>
    %61 = vector.shape_cast %57 : vector<8x32xf32> to vector<1x8x32xf32>
    %62 = vector.shape_cast %58 : vector<8x32xf32> to vector<1x8x32xf32>
    %63 = vector.shape_cast %59 : vector<8x32xf32> to vector<1x8x32xf32>
    %64 = tpu.concatenate %60, %61, %62, %63 in 0 : vector<1x8x32xf32>, vector<1x8x32xf32>, vector<1x8x32xf32>, vector<1x8x32xf32> -> vector<4x8x32xf32>
    %65 = arith.truncf %64 : vector<4x8x32xf32> to vector<4x8x32xbf16>
    "tpu.trace_start"() <{level = 10 : i32, message = "hqd,hkd->hqk"}> : () -> ()
    %cst_19 = arith.constant dense<0.000000e+00> : vector<4x8x8xf32>
    %66 = tpu.matmul %45, %55, %cst_19 {dimension_numbers = #tpu.dot_dimension_numbers<[2], [2], [1], [1], [0, 0, 0, 1, 1, 1], [0], [0]>} : vector<4x8x32xbf16>, vector<4x8x32xbf16>, vector<4x8x8xf32> -> vector<4x8x8xf32>
    "tpu.trace_stop"() : () -> ()
    %c0_20 = arith.constant 0 : index
    %c0_21 = arith.constant 0 : index
    %67 = vector.load %arg5[%c0_20, %c0_21] : memref<8x8xf32, #tpu.memory_space<vmem>>, vector<8x8xf32>
    %68 = vector.shape_cast %67 : vector<8x8xf32> to vector<1x8x8xf32>
    %69 = vector.broadcast %68 : vector<1x8x8xf32> to vector<4x8x8xf32>
    %70 = arith.addf %66, %69 : vector<4x8x8xf32>
    %cst_22 = arith.constant dense<0xFF800000> : vector<4x8xf32>
    %71 = vector.multi_reduction <maximumf>, %70, %cst_22 [2] : vector<4x8x8xf32> to vector<4x8xf32>
    %72 = vector.shape_cast %71 : vector<4x8xf32> to vector<4x8x1xf32>
    %73 = vector.broadcast %72 : vector<4x8x1xf32> to vector<4x8x8xf32>
    %74 = arith.subf %70, %73 : vector<4x8x8xf32>
    %75 = math.exp %74 : vector<4x8x8xf32>
    %cst_23 = arith.constant dense<0.000000e+00> : vector<4x8xf32>
    %76 = vector.multi_reduction <add>, %75, %cst_23 [2] : vector<4x8x8xf32> to vector<4x8xf32>
    %77 = vector.shape_cast %76 : vector<4x8xf32> to vector<4x8x1xf32>
    %78 = tpu.reciprocal %77 {approx = true} : vector<4x8x1xf32> -> vector<4x8x1xf32>
    %79 = vector.broadcast %78 : vector<4x8x1xf32> to vector<4x8x8xf32>
    %80 = arith.mulf %75, %79 : vector<4x8x8xf32>
    %81 = arith.truncf %80 : vector<4x8x8xf32> to vector<4x8x8xbf16>
    "tpu.trace_start"() <{level = 10 : i32, message = "hqk,hkd->hqd"}> : () -> ()
    %cst_24 = arith.constant dense<0.000000e+00> : vector<4x8x32xf32>
    %82 = tpu.matmul %81, %65, %cst_24 {dimension_numbers = #tpu.dot_dimension_numbers<[2], [1], [1], [2], [0, 0, 0, 1, 1, 2], [0], [0]>} : vector<4x8x8xbf16>, vector<4x8x32xbf16>, vector<4x8x32xf32> -> vector<4x8x32xf32>
    "tpu.trace_stop"() : () -> ()
    %83 = vector.extract_strided_slice %82 {offsets = [0, 0, 0], sizes = [1, 8, 32], strides = [1, 1, 1]} : vector<4x8x32xf32> to vector<1x8x32xf32>
    %84 = vector.shape_cast %83 : vector<1x8x32xf32> to vector<8x32xf32>
    %85 = vector.extract_strided_slice %82 {offsets = [1, 0, 0], sizes = [1, 8, 32], strides = [1, 1, 1]} : vector<4x8x32xf32> to vector<1x8x32xf32>
    %86 = vector.shape_cast %85 : vector<1x8x32xf32> to vector<8x32xf32>
    %87 = vector.extract_strided_slice %82 {offsets = [2, 0, 0], sizes = [1, 8, 32], strides = [1, 1, 1]} : vector<4x8x32xf32> to vector<1x8x32xf32>
    %88 = vector.shape_cast %87 : vector<1x8x32xf32> to vector<8x32xf32>
    %89 = vector.extract_strided_slice %82 {offsets = [3, 0, 0], sizes = [1, 8, 32], strides = [1, 1, 1]} : vector<4x8x32xf32> to vector<1x8x32xf32>
    %90 = vector.shape_cast %89 : vector<1x8x32xf32> to vector<8x32xf32>
    %91 = tpu.concatenate %84, %86, %88, %90 in 1 : vector<8x32xf32>, vector<8x32xf32>, vector<8x32xf32>, vector<8x32xf32> -> vector<8x128xf32>
    %92 = arith.truncf %91 : vector<8x128xf32> to vector<8x128xbf16>
    %c0_25 = arith.constant 0 : index
    %c0_26 = arith.constant 0 : index
    %c0_27 = arith.constant 0 : index
    %93 = vector.load %arg10[%c0_25, %c0_26, %c0_27] : memref<1x128x128xbf16, #tpu.memory_space<vmem>>, vector<1x128x128xbf16>
    %94 = vector.shape_cast %93 : vector<1x128x128xbf16> to vector<128x128xbf16>
    %cst_28 = arith.constant dense<0.000000e+00> : vector<8x128xf32>
    %95 = tpu.matmul %92, %94, %cst_28 {dimension_numbers = #tpu.dot_dimension_numbers<[1], [0], [0], [1], [0, 0, 1, 1], [], []>} : vector<8x128xbf16>, vector<128x128xbf16>, vector<8x128xf32> -> vector<8x128xf32>
    %c0_29 = arith.constant 0 : index
    %c0_30 = arith.constant 0 : index
    %c0_31 = arith.constant 0 : index
    %96 = vector.load %arg11[%c0_29, %c0_30, %c0_31] : memref<1x1x128xf32, #tpu.memory_space<vmem>>, vector<1x1x128xf32>
    %97 = vector.shape_cast %96 : vector<1x1x128xf32> to vector<1x128xf32>
    %98 = vector.broadcast %97 : vector<1x128xf32> to vector<8x128xf32>
    %99 = arith.addf %95, %98 : vector<8x128xf32>
    %100 = arith.addf %3, %99 : vector<8x128xf32>
    %c0_32 = arith.constant 0 : index
    %c0_33 = arith.constant 0 : index
    %c0_34 = arith.constant 0 : index
    %101 = vector.load %arg12[%c0_32, %c0_33, %c0_34] : memref<1x1x128xf32, #tpu.memory_space<vmem>>, vector<1x1x128xf32>
    %102 = vector.shape_cast %101 : vector<1x1x128xf32> to vector<1x128xf32>
    %c0_35 = arith.constant 0 : index
    %c0_36 = arith.constant 0 : index
    %c0_37 = arith.constant 0 : index
    %103 = vector.load %arg13[%c0_35, %c0_36, %c0_37] : memref<1x1x128xf32, #tpu.memory_space<vmem>>, vector<1x1x128xf32>
    %104 = vector.shape_cast %103 : vector<1x1x128xf32> to vector<1x128xf32>
    %cst_38 = arith.constant dense<0.000000e+00> : vector<8xf32>
    %105 = vector.multi_reduction <add>, %100, %cst_38 [1] : vector<8x128xf32> to vector<8xf32>
    %106 = vector.shape_cast %105 : vector<8xf32> to vector<8x1xf32>
    %cst_39 = arith.constant 1.280000e+02 : f32
    %107 = vector.broadcast %cst_39 : f32 to vector<8x1xf32>
    %108 = arith.divf %106, %107 : vector<8x1xf32>
    %109 = vector.broadcast %108 : vector<8x1xf32> to vector<8x128xf32>
    %110 = arith.subf %100, %109 : vector<8x128xf32>
    %111 = arith.mulf %110, %110 : vector<8x128xf32>
    %cst_40 = arith.constant dense<0.000000e+00> : vector<8xf32>
    %112 = vector.multi_reduction <add>, %111, %cst_40 [1] : vector<8x128xf32> to vector<8xf32>
    %113 = vector.shape_cast %112 : vector<8xf32> to vector<8x1xf32>
    %cst_41 = arith.constant 1.280000e+02 : f32
    %114 = vector.broadcast %cst_41 : f32 to vector<8x1xf32>
    %115 = arith.divf %113, %114 : vector<8x1xf32>
    %cst_42 = arith.constant 9.99999974E-6 : f32
    %116 = vector.broadcast %cst_42 : f32 to vector<8x1xf32>
    %117 = arith.addf %115, %116 : vector<8x1xf32>
    %118 = math.rsqrt %117 : vector<8x1xf32>
    %119 = vector.broadcast %118 : vector<8x1xf32> to vector<8x128xf32>
    %120 = arith.mulf %110, %119 : vector<8x128xf32>
    %121 = vector.broadcast %102 : vector<1x128xf32> to vector<8x128xf32>
    %122 = arith.mulf %120, %121 : vector<8x128xf32>
    %123 = vector.broadcast %104 : vector<1x128xf32> to vector<8x128xf32>
    %124 = arith.addf %122, %123 : vector<8x128xf32>
    %125 = arith.truncf %124 : vector<8x128xf32> to vector<8x128xbf16>
    %c0_43 = arith.constant 0 : index
    %c0_44 = arith.constant 0 : index
    %c0_45 = arith.constant 0 : index
    %126 = vector.load %arg14[%c0_43, %c0_44, %c0_45] : memref<1x128x512xbf16, #tpu.memory_space<vmem>>, vector<1x128x512xbf16>
    %127 = vector.shape_cast %126 : vector<1x128x512xbf16> to vector<128x512xbf16>
    %cst_46 = arith.constant dense<0.000000e+00> : vector<8x512xf32>
    %128 = tpu.matmul %125, %127, %cst_46 {dimension_numbers = #tpu.dot_dimension_numbers<[1], [0], [0], [1], [0, 0, 1, 1], [], []>} : vector<8x128xbf16>, vector<128x512xbf16>, vector<8x512xf32> -> vector<8x512xf32>
    %c0_47 = arith.constant 0 : index
    %c0_48 = arith.constant 0 : index
    %c0_49 = arith.constant 0 : index
    %129 = vector.load %arg15[%c0_47, %c0_48, %c0_49] : memref<1x1x512xf32, #tpu.memory_space<vmem>>, vector<1x1x512xf32>
    %130 = vector.shape_cast %129 : vector<1x1x512xf32> to vector<1x512xf32>
    %131 = vector.broadcast %130 : vector<1x512xf32> to vector<8x512xf32>
    %132 = arith.addf %128, %131 : vector<8x512xf32>
    %133 = arith.mulf %132, %132 : vector<8x512xf32>
    %134 = arith.mulf %132, %133 : vector<8x512xf32>
    %cst_50 = arith.constant 4.471500e-02 : f32
    %135 = vector.broadcast %cst_50 : f32 to vector<8x512xf32>
    %136 = arith.mulf %135, %134 : vector<8x512xf32>
    %137 = arith.addf %132, %136 : vector<8x512xf32>
    %cst_51 = arith.constant 0.797884583 : f32
    %138 = vector.broadcast %cst_51 : f32 to vector<8x512xf32>
    %139 = arith.mulf %138, %137 : vector<8x512xf32>
    %140 = math.tanh %139 : vector<8x512xf32>
    %cst_52 = arith.constant 1.000000e+00 : f32
    %141 = vector.broadcast %cst_52 : f32 to vector<8x512xf32>
    %142 = arith.addf %141, %140 : vector<8x512xf32>
    %cst_53 = arith.constant 5.000000e-01 : f32
    %143 = vector.broadcast %cst_53 : f32 to vector<8x512xf32>
    %144 = arith.mulf %143, %142 : vector<8x512xf32>
    %145 = arith.mulf %132, %144 : vector<8x512xf32>
    %146 = arith.truncf %145 : vector<8x512xf32> to vector<8x512xbf16>
    %c0_54 = arith.constant 0 : index
    %c0_55 = arith.constant 0 : index
    %c0_56 = arith.constant 0 : index
    %147 = vector.load %arg16[%c0_54, %c0_55, %c0_56] : memref<1x512x128xbf16, #tpu.memory_space<vmem>>, vector<1x512x128xbf16>
    %148 = vector.shape_cast %147 : vector<1x512x128xbf16> to vector<512x128xbf16>
    %cst_57 = arith.constant dense<0.000000e+00> : vector<8x128xf32>
    %149 = tpu.matmul %146, %148, %cst_57 {dimension_numbers = #tpu.dot_dimension_numbers<[1], [0], [0], [1], [0, 0, 1, 1], [], []>} : vector<8x512xbf16>, vector<512x128xbf16>, vector<8x128xf32> -> vector<8x128xf32>
    %c0_58 = arith.constant 0 : index
    %c0_59 = arith.constant 0 : index
    %c0_60 = arith.constant 0 : index
    %150 = vector.load %arg17[%c0_58, %c0_59, %c0_60] : memref<1x1x128xf32, #tpu.memory_space<vmem>>, vector<1x1x128xf32>
    %151 = vector.shape_cast %150 : vector<1x1x128xf32> to vector<1x128xf32>
    %152 = vector.broadcast %151 : vector<1x128xf32> to vector<8x128xf32>
    %153 = arith.addf %149, %152 : vector<8x128xf32>
    %154 = arith.addf %100, %153 : vector<8x128xf32>
    %c0_61 = arith.constant 0 : index
    %c0_62 = arith.constant 0 : index
    %155 = vector.load %arg22[%c0_61, %c0_62] : memref<8x128xf32, #tpu.memory_space<vmem>>, vector<8x128xf32>
    tpu.vector_store %arg22[%c0_61, %c0_62], %154 {strides = array<i32>} : memref<8x128xf32, #tpu.memory_space<vmem>>, vector<8x128xf32>,
    %c1_i32 = arith.constant 1 : i32
    %156 = arith.cmpi eq, %arg1, %c1_i32 : i32
    %157 = arith.extui %156 : i1 to i32
    %c0_i32_63 = arith.constant 0 : i32
    %158 = arith.cmpi ne, %157, %c0_i32_63 : i32
    scf.if %158 {
      %c0_64 = arith.constant 0 : index
      %c0_65 = arith.constant 0 : index
      %159 = vector.load %arg22[%c0_64, %c0_65] : memref<8x128xf32, #tpu.memory_space<vmem>>, vector<8x128xf32>
      %c0_66 = arith.constant 0 : index
      %c0_67 = arith.constant 0 : index
      %160 = vector.load %arg18[%c0_66, %c0_67] : memref<1x128xf32, #tpu.memory_space<vmem>>, vector<1x128xf32>
      %c0_68 = arith.constant 0 : index
      %c0_69 = arith.constant 0 : index
      %161 = vector.load %arg19[%c0_68, %c0_69] : memref<1x128xf32, #tpu.memory_space<vmem>>, vector<1x128xf32>
      %cst_70 = arith.constant dense<0.000000e+00> : vector<8xf32>
      %162 = vector.multi_reduction <add>, %159, %cst_70 [1] : vector<8x128xf32> to vector<8xf32>
      %163 = vector.shape_cast %162 : vector<8xf32> to vector<8x1xf32>
      %cst_71 = arith.constant 1.280000e+02 : f32
      %164 = vector.broadcast %cst_71 : f32 to vector<8x1xf32>
      %165 = arith.divf %163, %164 : vector<8x1xf32>
      %166 = vector.broadcast %165 : vector<8x1xf32> to vector<8x128xf32>
      %167 = arith.subf %159, %166 : vector<8x128xf32>
      %168 = arith.mulf %167, %167 : vector<8x128xf32>
      %cst_72 = arith.constant dense<0.000000e+00> : vector<8xf32>
      %169 = vector.multi_reduction <add>, %168, %cst_72 [1] : vector<8x128xf32> to vector<8xf32>
      %170 = vector.shape_cast %169 : vector<8xf32> to vector<8x1xf32>
      %cst_73 = arith.constant 1.280000e+02 : f32
      %171 = vector.broadcast %cst_73 : f32 to vector<8x1xf32>
      %172 = arith.divf %170, %171 : vector<8x1xf32>
      %cst_74 = arith.constant 9.99999974E-6 : f32
      %173 = vector.broadcast %cst_74 : f32 to vector<8x1xf32>
      %174 = arith.addf %172, %173 : vector<8x1xf32>
      %175 = math.rsqrt %174 : vector<8x1xf32>
      %176 = vector.broadcast %175 : vector<8x1xf32> to vector<8x128xf32>
      %177 = arith.mulf %167, %176 : vector<8x128xf32>
      %178 = vector.broadcast %160 : vector<1x128xf32> to vector<8x128xf32>
      %179 = arith.mulf %177, %178 : vector<8x128xf32>
      %180 = vector.broadcast %161 : vector<1x128xf32> to vector<8x128xf32>
      %181 = arith.addf %179, %180 : vector<8x128xf32>
      %182 = arith.truncf %181 : vector<8x128xf32> to vector<8x128xbf16>
      %c0_75 = arith.constant 0 : index
      %c0_76 = arith.constant 0 : index
      %183 = vector.load %arg20[%c0_75, %c0_76] : memref<128x256xbf16, #tpu.memory_space<vmem>>, vector<128x256xbf16>
      %cst_77 = arith.constant dense<0.000000e+00> : vector<8x256xf32>
      %184 = tpu.matmul %182, %183, %cst_77 {dimension_numbers = #tpu.dot_dimension_numbers<[1], [0], [0], [1], [0, 0, 1, 1], [], []>} : vector<8x128xbf16>, vector<128x256xbf16>, vector<8x256xf32> -> vector<8x256xf32>
      %c0_78 = arith.constant 0 : index
      %c0_79 = arith.constant 0 : index
      %c0_80 = arith.constant 0 : index
      %185 = vector.load %arg21[%c0_78, %c0_79, %c0_80] : memref<1x8x256xf32, #tpu.memory_space<vmem>>, vector<1x8x256xf32>
      %186 = vector.shape_cast %185 : vector<1x8x256xf32> to vector<8x256xf32>
      %187 = vector.shape_cast %184 : vector<8x256xf32> to vector<1x8x256xf32>
      tpu.vector_store %arg21[%c0_78, %c0_79, %c0_80], %187 {strides = array<i32>} : memref<1x8x256xf32, #tpu.memory_space<vmem>>, vector<1x8x256xf32>,
    } else {
    }
    return
  }
  func.func @transform_0(%arg0: i32, %arg1: i32) -> (i32, i32, i32) {
    %c0_i32 = arith.constant 0 : i32
    %c0_i32_0 = arith.constant 0 : i32
    %c0_i32_1 = arith.constant 0 : i32
    return %arg0, %c0_i32, %c0_i32_0 : i32, i32, i32
  }
  func.func @transform_1(%arg0: i32, %arg1: i32) -> (i32, i32) {
    %c0_i32 = arith.constant 0 : i32
    %c0_i32_0 = arith.constant 0 : i32
    %c0_i32_1 = arith.constant 0 : i32
    return %c0_i32, %c0_i32_0 : i32, i32
  }
  func.func @transform_2(%arg0: i32, %arg1: i32) -> (i32, i32) {
    %c0_i32 = arith.constant 0 : i32
    %c0_i32_0 = arith.constant 0 : i32
    %c0_i32_1 = arith.constant 0 : i32
    return %c0_i32, %c0_i32_0 : i32, i32
  }
  func.func @transform_3(%arg0: i32, %arg1: i32) -> (i32, i32) {
    %c0_i32 = arith.constant 0 : i32
    %c0_i32_0 = arith.constant 0 : i32
    %c0_i32_1 = arith.constant 0 : i32
    return %c0_i32, %c0_i32_0 : i32, i32
  }
  func.func @transform_4(%arg0: i32, %arg1: i32) -> (i32, i32, i32) {
    %c0_i32 = arith.constant 0 : i32
    %c0_i32_0 = arith.constant 0 : i32
    %c0_i32_1 = arith.constant 0 : i32
    return %arg1, %c0_i32, %c0_i32_0 : i32, i32, i32
  }
  func.func @transform_5(%arg0: i32, %arg1: i32) -> (i32, i32, i32) {
    %c0_i32 = arith.constant 0 : i32
    %c0_i32_0 = arith.constant 0 : i32
    %c0_i32_1 = arith.constant 0 : i32
    return %arg1, %c0_i32, %c0_i32_0 : i32, i32, i32
  }
  func.func @transform_6(%arg0: i32, %arg1: i32) -> (i32, i32, i32) {
    %c0_i32 = arith.constant 0 : i32
    %c0_i32_0 = arith.constant 0 : i32
    %c0_i32_1 = arith.constant 0 : i32
    return %arg1, %c0_i32, %c0_i32_0 : i32, i32, i32
  }
  func.func @transform_7(%arg0: i32, %arg1: i32) -> (i32, i32, i32) {
    %c0_i32 = arith.constant 0 : i32
    %c0_i32_0 = arith.constant 0 : i32
    %c0_i32_1 = arith.constant 0 : i32
    return %arg1, %c0_i32, %c0_i32_0 : i32, i32, i32
  }
  func.func @transform_8(%arg0: i32, %arg1: i32) -> (i32, i32, i32) {
    %c0_i32 = arith.constant 0 : i32
    %c0_i32_0 = arith.constant 0 : i32
    %c0_i32_1 = arith.constant 0 : i32
    return %arg1, %c0_i32, %c0_i32_0 : i32, i32, i32
  }
  func.func @transform_9(%arg0: i32, %arg1: i32) -> (i32, i32, i32) {
    %c0_i32 = arith.constant 0 : i32
    %c0_i32_0 = arith.constant 0 : i32
    %c0_i32_1 = arith.constant 0 : i32
    return %arg1, %c0_i32, %c0_i32_0 : i32, i32, i32
  }
  func.func @transform_10(%arg0: i32, %arg1: i32) -> (i32, i32, i32) {
    %c0_i32 = arith.constant 0 : i32
    %c0_i32_0 = arith.constant 0 : i32
    %c0_i32_1 = arith.constant 0 : i32
    return %arg1, %c0_i32, %c0_i32_0 : i32, i32, i32
  }
  func.func @transform_11(%arg0: i32, %arg1: i32) -> (i32, i32, i32) {
    %c0_i32 = arith.constant 0 : i32
    %c0_i32_0 = arith.constant 0 : i32
    %c0_i32_1 = arith.constant 0 : i32
    return %arg1, %c0_i32, %c0_i32_0 : i32, i32, i32
  }
  func.func @transform_12(%arg0: i32, %arg1: i32) -> (i32, i32, i32) {
    %c0_i32 = arith.constant 0 : i32
    %c0_i32_0 = arith.constant 0 : i32
    %c0_i32_1 = arith.constant 0 : i32
    return %arg1, %c0_i32, %c0_i32_0 : i32, i32, i32
  }
  func.func @transform_13(%arg0: i32, %arg1: i32) -> (i32, i32, i32) {
    %c0_i32 = arith.constant 0 : i32
    %c0_i32_0 = arith.constant 0 : i32
    %c0_i32_1 = arith.constant 0 : i32
    return %arg1, %c0_i32, %c0_i32_0 : i32, i32, i32
  }
  func.func @transform_14(%arg0: i32, %arg1: i32) -> (i32, i32, i32) {
    %c0_i32 = arith.constant 0 : i32
    %c0_i32_0 = arith.constant 0 : i32
    %c0_i32_1 = arith.constant 0 : i32
    return %arg1, %c0_i32, %c0_i32_0 : i32, i32, i32
  }
  func.func @transform_15(%arg0: i32, %arg1: i32) -> (i32, i32, i32) {
    %c0_i32 = arith.constant 0 : i32
    %c0_i32_0 = arith.constant 0 : i32
    %c0_i32_1 = arith.constant 0 : i32
    return %arg1, %c0_i32, %c0_i32_0 : i32, i32, i32
  }
  func.func @transform_16(%arg0: i32, %arg1: i32) -> (i32, i32) {
    %c0_i32 = arith.constant 0 : i32
    %c0_i32_0 = arith.constant 0 : i32
    %c0_i32_1 = arith.constant 0 : i32
    return %c0_i32, %c0_i32_0 : i32, i32
  }
  func.func @transform_17(%arg0: i32, %arg1: i32) -> (i32, i32) {
    %c0_i32 = arith.constant 0 : i32
    %c0_i32_0 = arith.constant 0 : i32
    %c0_i32_1 = arith.constant 0 : i32
    return %c0_i32, %c0_i32_0 : i32, i32
  }
  func.func @transform_18(%arg0: i32, %arg1: i32) -> (i32, i32) {
    %c0_i32 = arith.constant 0 : i32
    %c0_i32_0 = arith.constant 0 : i32
    %c0_i32_1 = arith.constant 0 : i32
    return %c0_i32, %c0_i32_0 : i32, i32
  }
  func.func @transform_19(%arg0: i32, %arg1: i32) -> (i32, i32, i32) {
    %c0_i32 = arith.constant 0 : i32
    %c0_i32_0 = arith.constant 0 : i32
    %c0_i32_1 = arith.constant 0 : i32
    return %arg0, %c0_i32, %c0_i32_0 : i32, i32, i32
  }
}

</mosaic_0001>

<llo_original>
// kernel: idea_predictor_forward.1
$region0: #{idea_predictor_forward.1}
  #allocation0 [shape = 'u32[]', space=smem, size = 0x4, offset = 0x4, fixed_abs, tag = 'smem constant byte address 0x4 - core index']
  #allocation1 [shape = 'u32[72,128]{1,0:T(1,128)}', space=vmem, size = 0x9000, scoped, tag = 'internal scratch']
  #allocation2 [shape = 'f32[8,128]{1,0:T(8,128)}', space=vmem, size = 0x1000, scoped, tag = 'scratch operand']
  %s0 = inlined_call_operand.vmem [shape: f32[2,8,256], index: 0, kind: input, shape index: {}]
  %s1 = inlined_call_operand.vmem [shape: bf16[256,128], index: 1, kind: input, shape index: {}]
  %s2 = inlined_call_operand.vmem [shape: f32[8,128], index: 2, kind: input, shape index: {}]
  %s3 = inlined_call_operand.vmem [shape: f32[8,8], index: 3, kind: input, shape index: {}]
  %s4 = inlined_call_operand.vmem [shape: f32[2,1,128], index: 4, kind: input, shape index: {}]
  %s5 = inlined_call_operand.vmem [shape: f32[2,1,128], index: 5, kind: input, shape index: {}]
  %s6 = inlined_call_operand.vmem [shape: bf16[2,128,384], index: 6, kind: input, shape index: {}]
  %s7 = inlined_call_operand.vmem [shape: f32[2,1,384], index: 7, kind: input, shape index: {}]
  %s8 = inlined_call_operand.vmem [shape: bf16[2,128,128], index: 8, kind: input, shape index: {}]
  %s9 = inlined_call_operand.vmem [shape: f32[2,1,128], index: 9, kind: input, shape index: {}]
  %s10 = inlined_call_operand.vmem [shape: f32[2,1,128], index: 10, kind: input, shape index: {}]
  %s11 = inlined_call_operand.vmem [shape: f32[2,1,128], index: 11, kind: input, shape index: {}]
  %s12 = inlined_call_operand.vmem [shape: bf16[2,128,512], index: 12, kind: input, shape index: {}]
  %s13 = inlined_call_operand.vmem [shape: f32[2,1,512], index: 13, kind: input, shape index: {}]
  %s14 = inlined_call_operand.vmem [shape: bf16[2,512,128], index: 14, kind: input, shape index: {}]
  %s15 = inlined_call_operand.vmem [shape: f32[2,1,128], index: 15, kind: input, shape index: {}]
  %s16 = inlined_call_operand.vmem [shape: f32[1,128], index: 16, kind: input, shape index: {}]
  %s17 = inlined_call_operand.vmem [shape: f32[1,128], index: 17, kind: input, shape index: {}]
  %s18 = inlined_call_operand.vmem [shape: bf16[128,256], index: 18, kind: input, shape index: {}]
  %s19 = inlined_call_operand.hbm [shape: f32[2,8,256], index: 19, kind: output, shape index: {}]
  %s20 = sld [smem:[#allocation0]]
  $region117: #{idea_predictor_forward.1} parent=0
    _
  %s22 = ssub.s32 1, %s20
  %s23 = scalar_select 0, %s22, %s20
  $region1: #{idea_predictor_forward.1} parent=0
    #allocation3 [shape = 'u8[16384]{0}', space=vmem, size = 0x4000, scoped, tag = 'output window, operand 0']
    #allocation4 [shape = 's32[2]{0}', space=sflag, size = 0x8, scoped, tag = 'scoped memory for idea_predictor_forward.1']
    %24 = vsyncpa [#allocation4], 0
    %s25 = scalar_lea.sflag [#allocation4], 1
    %26 = vsyncpa %s25, 0
    loop: start=0, step=1, limit=6
    $region2: #{idea_predictor_forward.1} parent=1 // loop_pre_header
      _
    $region3: #{idea_predictor_forward.1} parent=1 // loop_header
      %s28 = sphi 0, %s32
      %p29 = scmp.ge.s32.totalorder %s28, 6
      %s35 = sphi 0, %s47
      %s36 = sphi 0, %s43
      %s37 = sphi 0, %s35
      %s38 = sphi 0, %s36
      %s39 = sphi 0, %s37
      %s40 = sphi 0, %s38
      %s50 = sphi 0, %s52
      %s53 = sphi 0, %s50
      %s54 = sphi 0, %s53
      %s70 = sphi 0, %s54
      %s74 = sphi 0, %s74
      %s76 = sphi 0, %s74
      %s77 = sphi 0, %s76
      %s91 = sphi 0, %s77
      %s95 = sphi 0, %s95
      %s97 = sphi 0, %s95
      %s98 = sphi 0, %s97
      %s112 = sphi 0, %s98
      %s116 = sphi 0, %s116
      %s118 = sphi 0, %s116
      %s119 = sphi 0, %s118
      %s133 = sphi 0, %s119
      %s139 = sphi 0, %s141
      %s142 = sphi 0, %s139
      %s143 = sphi 0, %s142
      %s159 = sphi 0, %s143
      %s165 = sphi 0, %s167
      %s168 = sphi 0, %s165
      %s169 = sphi 0, %s168
      %s185 = sphi 0, %s169
      %s191 = sphi 0, %s193
      %s194 = sphi 0, %s191
      %s195 = sphi 0, %s194
      %s211 = sphi 0, %s195
      %s217 = sphi 0, %s219
      %s220 = sphi 0, %s217
      %s221 = sphi 0, %s220
      %s237 = sphi 0, %s221
      %s243 = sphi 0, %s245
      %s246 = sphi 0, %s243
      %s247 = sphi 0, %s246
      %s263 = sphi 0, %s247
      %s269 = sphi 0, %s271
      %s272 = sphi 0, %s269
      %s273 = sphi 0, %s272
      %s289 = sphi 0, %s273
      %s295 = sphi 0, %s297
      %s298 = sphi 0, %s295
      %s299 = sphi 0, %s298
      %s315 = sphi 0, %s299
      %s321 = sphi 0, %s323
      %s324 = sphi 0, %s321
      %s325 = sphi 0, %s324
      %s341 = sphi 0, %s325
      %s347 = sphi 0, %s349
      %s350 = sphi 0, %s347
      %s351 = sphi 0, %s350
      %s367 = sphi 0, %s351
      %s373 = sphi 0, %s375
      %s376 = sphi 0, %s373
      %s377 = sphi 0, %s376
      %s393 = sphi 0, %s377
      %s399 = sphi 0, %s401
      %s402 = sphi 0, %s399
      %s403 = sphi 0, %s402
      %s419 = sphi 0, %s403
      %s425 = sphi 0, %s427
      %s428 = sphi 0, %s425
      %s429 = sphi 0, %s428
      %s445 = sphi 0, %s429
      %s449 = sphi 0, %s449
      %s451 = sphi 0, %s449
      %s452 = sphi 0, %s451
      %s466 = sphi 0, %s452
      %s470 = sphi 0, %s470
      %s472 = sphi 0, %s470
      %s473 = sphi 0, %s472
      %s487 = sphi 0, %s473
      %s491 = sphi 0, %s491
      %s493 = sphi 0, %s491
      %s494 = sphi 0, %s493
      %s508 = sphi 0, %s494
      %s514 = sphi 0, %s516
      %s517 = sphi 0, %s514
      %s518 = sphi 0, %s517
      %s534 = sphi 0, %s518
    $region4: #{idea_predictor_forward.1} parent=1 // loop_header_branch
      %31 = sbr.rel (%p29) target = $region8
    $region5: #{idea_predictor_forward.1} parent=1 // loop_body
      %s33 = ssub.s32 %s28, 1
      %s34 = ssub.s32 %s28, 2
      %s41 = sadd.s32 1, %s36
      %p42 = scmp.ge.s32.totalorder %s41, 2
      %s43 = scalar_select %p42, 0, %s41
      %s44 = sadd.s32 1, %s35
      %s45 = scalar_select %p42, %s44, %s35
      %p46 = scmp.ge.s32.totalorder %s45, 2
      %s47 = scalar_select %p46, 0, %s45
      %s48 = ssub.s32 %s35, %s47
      %p49 = scmp.eq.s32.totalorder %s48, 0
      %s51 = sadd.s32 %s50, 1
      %s52 = scalar_select %p49, %s50, %s51
      %p55 = pneg %p49
      %p56 = scmp.eq.s32.totalorder %s28, 3
      %p57 = por %p55, %p56
      %p58 = scmp.ne.s32.totalorder %s50, %s53
      %p59 = scmp.eq.s32.totalorder %s28, 0
      %p60 = por %p58, %p59
      %p61 = scmp.ne.s32.totalorder %s50, %s53
      %p62 = scmp.eq.s32.totalorder %s33, 3
      %p63 = por %p61, %p62
      %p64 = scmp.ne.s32.totalorder %s53, %s54
      %p65 = scmp.eq.s32.totalorder %s33, 0
      %p66 = por %p64, %p65
      %p67 = scmp.ne.s32.totalorder %s53, %s54
      %p68 = scmp.eq.s32.totalorder %s34, 3
      %p69 = por %p67, %p68
      %p71 = scmp.ne.s32.totalorder %s54, %s70
      %p72 = scmp.eq.s32.totalorder %s34, 0
      %p73 = por %p71, %p72
      %s75 = sadd.s32 %s74, 1
      %p78 = scmp.eq.s32.totalorder %s28, 3
      %p79 = scmp.ne.s32.totalorder %s74, %s76
      %p80 = scmp.eq.s32.totalorder %s28, 0
      %p81 = por %p79, %p80
      %p82 = scmp.ne.s32.totalorder %s74, %s76
      %p83 = scmp.eq.s32.totalorder %s33, 3
      %p84 = por %p82, %p83
      %p85 = scmp.ne.s32.totalorder %s76, %s77
      %p86 = scmp.eq.s32.totalorder %s33, 0
      %p87 = por %p85, %p86
      %p88 = scmp.ne.s32.totalorder %s76, %s77
      %p89 = scmp.eq.s32.totalorder %s34, 3
      %p90 = por %p88, %p89
      %p92 = scmp.ne.s32.totalorder %s77, %s91
      %p93 = scmp.eq.s32.totalorder %s34, 0
      %p94 = por %p92, %p93
      %s96 = sadd.s32 %s95, 1
      %p99 = scmp.eq.s32.totalorder %s28, 3
      %p100 = scmp.ne.s32.totalorder %s95, %s97
      %p101 = scmp.eq.s32.totalorder %s28, 0
      %p102 = por %p100, %p101
      %p103 = scmp.ne.s32.totalorder %s95, %s97
      %p104 = scmp.eq.s32.totalorder %s33, 3
      %p105 = por %p103, %p104
      %p106 = scmp.ne.s32.totalorder %s97, %s98
      %p107 = scmp.eq.s32.totalorder %s33, 0
      %p108 = por %p106, %p107
      %p109 = scmp.ne.s32.totalorder %s97, %s98
      %p110 = scmp.eq.s32.totalorder %s34, 3
      %p111 = por %p109, %p110
      %p113 = scmp.ne.s32.totalorder %s98, %s112
      %p114 = scmp.eq.s32.totalorder %s34, 0
      %p115 = por %p113, %p114
      %s117 = sadd.s32 %s116, 1
      %p120 = scmp.eq.s32.totalorder %s28, 3
      %p121 = scmp.ne.s32.totalorder %s116, %s118
      %p122 = scmp.eq.s32.totalorder %s28, 0
      %p123 = por %p121, %p122
      %p124 = scmp.ne.s32.totalorder %s116, %s118
      %p125 = scmp.eq.s32.totalorder %s33, 3
      %p126 = por %p124, %p125
      %p127 = scmp.ne.s32.totalorder %s118, %s119
      %p128 = scmp.eq.s32.totalorder %s33, 0
      %p129 = por %p127, %p128
      %p130 = scmp.ne.s32.totalorder %s118, %s119
      %p131 = scmp.eq.s32.totalorder %s34, 3
      %p132 = por %p130, %p131
      %p134 = scmp.ne.s32.totalorder %s119, %s133
      %p135 = scmp.eq.s32.totalorder %s34, 0
      %p136 = por %p134, %p135
      %s137 = ssub.s32 %s36, %s43
      %p138 = scmp.eq.s32.totalorder %s137, 0
      %s140 = sadd.s32 %s139, 1
      %s141 = scalar_select %p138, %s139, %s140
      %p144 = pneg %p138
      %p145 = scmp.eq.s32.totalorder %s28, 3
      %p146 = por %p144, %p145
      %p147 = scmp.ne.s32.totalorder %s139, %s142
      %p148 = scmp.eq.s32.totalorder %s28, 0
      %p149 = por %p147, %p148
      %p150 = scmp.ne.s32.totalorder %s139, %s142
      %p151 = scmp.eq.s32.totalorder %s33, 3
      %p152 = por %p150, %p151
      %p153 = scmp.ne.s32.totalorder %s142, %s143
      %p154 = scmp.eq.s32.totalorder %s33, 0
      %p155 = por %p153, %p154
      %p156 = scmp.ne.s32.totalorder %s142, %s143
      %p157 = scmp.eq.s32.totalorder %s34, 3
      %p158 = por %p156, %p157
      %p160 = scmp.ne.s32.totalorder %s143, %s159
      %p161 = scmp.eq.s32.totalorder %s34, 0
      %p162 = por %p160, %p161
      %s163 = ssub.s32 %s36, %s43
      %p164 = scmp.eq.s32.totalorder %s163, 0
      %s166 = sadd.s32 %s165, 1
      %s167 = scalar_select %p164, %s165, %s166
      %p170 = pneg %p164
      %p171 = scmp.eq.s32.totalorder %s28, 3
      %p172 = por %p170, %p171
      %p173 = scmp.ne.s32.totalorder %s165, %s168
      %p174 = scmp.eq.s32.totalorder %s28, 0
      %p175 = por %p173, %p174
      %p176 = scmp.ne.s32.totalorder %s165, %s168
      %p177 = scmp.eq.s32.totalorder %s33, 3
      %p178 = por %p176, %p177
      %p179 = scmp.ne.s32.totalorder %s168, %s169
      %p180 = scmp.eq.s32.totalorder %s33, 0
      %p181 = por %p179, %p180
      %p182 = scmp.ne.s32.totalorder %s168, %s169
      %p183 = scmp.eq.s32.totalorder %s34, 3
      %p184 = por %p182, %p183
      %p186 = scmp.ne.s32.totalorder %s169, %s185
      %p187 = scmp.eq.s32.totalorder %s34, 0
      %p188 = por %p186, %p187
      %s189 = ssub.s32 %s36, %s43
      %p190 = scmp.eq.s32.totalorder %s189, 0
      %s192 = sadd.s32 %s191, 1
      %s193 = scalar_select %p190, %s191, %s192
      %p196 = pneg %p190
      %p197 = scmp.eq.s32.totalorder %s28, 3
      %p198 = por %p196, %p197
      %p199 = scmp.ne.s32.totalorder %s191, %s194
      %p200 = scmp.eq.s32.totalorder %s28, 0
      %p201 = por %p199, %p200
      %p202 = scmp.ne.s32.totalorder %s191, %s194
      %p203 = scmp.eq.s32.totalorder %s33, 3
      %p204 = por %p202, %p203
      %p205 = scmp.ne.s32.totalorder %s194, %s195
      %p206 = scmp.eq.s32.totalorder %s33, 0
      %p207 = por %p205, %p206
      %p208 = scmp.ne.s32.totalorder %s194, %s195
      %p209 = scmp.eq.s32.totalorder %s34, 3
      %p210 = por %p208, %p209
      %p212 = scmp.ne.s32.totalorder %s195, %s211
      %p213 = scmp.eq.s32.totalorder %s34, 0
      %p214 = por %p212, %p213
      %s215 = ssub.s32 %s36, %s43
      %p216 = scmp.eq.s32.totalorder %s215, 0
      %s218 = sadd.s32 %s217, 1
      %s219 = scalar_select %p216, %s217, %s218
      %p222 = pneg %p216
      %p223 = scmp.eq.s32.totalorder %s28, 3
      %p224 = por %p222, %p223
      %p225 = scmp.ne.s32.totalorder %s217, %s220
      %p226 = scmp.eq.s32.totalorder %s28, 0
      %p227 = por %p225, %p226
      %p228 = scmp.ne.s32.totalorder %s217, %s220
      %p229 = scmp.eq.s32.totalorder %s33, 3
      %p230 = por %p228, %p229
      %p231 = scmp.ne.s32.totalorder %s220, %s221
      %p232 = scmp.eq.s32.totalorder %s33, 0
      %p233 = por %p231, %p232
      %p234 = scmp.ne.s32.totalorder %s220, %s221
      %p235 = scmp.eq.s32.totalorder %s34, 3
      %p236 = por %p234, %p235
      %p238 = scmp.ne.s32.totalorder %s221, %s237
      %p239 = scmp.eq.s32.totalorder %s34, 0
      %p240 = por %p238, %p239
      %s241 = ssub.s32 %s36, %s43
      %p242 = scmp.eq.s32.totalorder %s241, 0
      %s244 = sadd.s32 %s243, 1
      %s245 = scalar_select %p242, %s243, %s244
      %p248 = pneg %p242
      %p249 = scmp.eq.s32.totalorder %s28, 3
      %p250 = por %p248, %p249
      %p251 = scmp.ne.s32.totalorder %s243, %s246
      %p252 = scmp.eq.s32.totalorder %s28, 0
      %p253 = por %p251, %p252
      %p254 = scmp.ne.s32.totalorder %s243, %s246
      %p255 = scmp.eq.s32.totalorder %s33, 3
      %p256 = por %p254, %p255
      %p257 = scmp.ne.s32.totalorder %s246, %s247
      %p258 = scmp.eq.s32.totalorder %s33, 0
      %p259 = por %p257, %p258
      %p260 = scmp.ne.s32.totalorder %s246, %s247
      %p261 = scmp.eq.s32.totalorder %s34, 3
      %p262 = por %p260, %p261
      %p264 = scmp.ne.s32.totalorder %s247, %s263
      %p265 = scmp.eq.s32.totalorder %s34, 0
      %p266 = por %p264, %p265
      %s267 = ssub.s32 %s36, %s43
      %p268 = scmp.eq.s32.totalorder %s267, 0
      %s270 = sadd.s32 %s269, 1
      %s271 = scalar_select %p268, %s269, %s270
      %p274 = pneg %p268
      %p275 = scmp.eq.s32.totalorder %s28, 3
      %p276 = por %p274, %p275
      %p277 = scmp.ne.s32.totalorder %s269, %s272
      %p278 = scmp.eq.s32.totalorder %s28, 0
      %p279 = por %p277, %p278
      %p280 = scmp.ne.s32.totalorder %s269, %s272
      %p281 = scmp.eq.s32.totalorder %s33, 3
      %p282 = por %p280, %p281
      %p283 = scmp.ne.s32.totalorder %s272, %s273
      %p284 = scmp.eq.s32.totalorder %s33, 0
      %p285 = por %p283, %p284
      %p286 = scmp.ne.s32.totalorder %s272, %s273
      %p287 = scmp.eq.s32.totalorder %s34, 3
      %p288 = por %p286, %p287
      %p290 = scmp.ne.s32.totalorder %s273, %s289
      %p291 = scmp.eq.s32.totalorder %s34, 0
      %p292 = por %p290, %p291
      %s293 = ssub.s32 %s36, %s43
      %p294 = scmp.eq.s32.totalorder %s293, 0
      %s296 = sadd.s32 %s295, 1
      %s297 = scalar_select %p294, %s295, %s296
      %p300 = pneg %p294
      %p301 = scmp.eq.s32.totalorder %s28, 3
      %p302 = por %p300, %p301
      %p303 = scmp.ne.s32.totalorder %s295, %s298
      %p304 = scmp.eq.s32.totalorder %s28, 0
      %p305 = por %p303, %p304
      %p306 = scmp.ne.s32.totalorder %s295, %s298
      %p307 = scmp.eq.s32.totalorder %s33, 3
      %p308 = por %p306, %p307
      %p309 = scmp.ne.s32.totalorder %s298, %s299
      %p310 = scmp.eq.s32.totalorder %s33, 0
      %p311 = por %p309, %p310
      %p312 = scmp.ne.s32.totalorder %s298, %s299
      %p313 = scmp.eq.s32.totalorder %s34, 3
      %p314 = por %p312, %p313
      %p316 = scmp.ne.s32.totalorder %s299, %s315
      %p317 = scmp.eq.s32.totalorder %s34, 0
      %p318 = por %p316, %p317
      %s319 = ssub.s32 %s36, %s43
      %p320 = scmp.eq.s32.totalorder %s319, 0
      %s322 = sadd.s32 %s321, 1
      %s323 = scalar_select %p320, %s321, %s322
      %p326 = pneg %p320
      %p327 = scmp.eq.s32.totalorder %s28, 3
      %p328 = por %p326, %p327
      %p329 = scmp.ne.s32.totalorder %s321, %s324
      %p330 = scmp.eq.s32.totalorder %s28, 0
      %p331 = por %p329, %p330
      %p332 = scmp.ne.s32.totalorder %s321, %s324
      %p333 = scmp.eq.s32.totalorder %s33, 3
      %p334 = por %p332, %p333
      %p335 = scmp.ne.s32.totalorder %s324, %s325
      %p336 = scmp.eq.s32.totalorder %s33, 0
      %p337 = por %p335, %p336
      %p338 = scmp.ne.s32.totalorder %s324, %s325
      %p339 = scmp.eq.s32.totalorder %s34, 3
      %p340 = por %p338, %p339
      %p342 = scmp.ne.s32.totalorder %s325, %s341
      %p343 = scmp.eq.s32.totalorder %s34, 0
      %p344 = por %p342, %p343
      %s345 = ssub.s32 %s36, %s43
      %p346 = scmp.eq.s32.totalorder %s345, 0
      %s348 = sadd.s32 %s347, 1
      %s349 = scalar_select %p346, %s347, %s348
      %p352 = pneg %p346
      %p353 = scmp.eq.s32.totalorder %s28, 3
      %p354 = por %p352, %p353
      %p355 = scmp.ne.s32.totalorder %s347, %s350
      %p356 = scmp.eq.s32.totalorder %s28, 0
      %p357 = por %p355, %p356
      %p358 = scmp.ne.s32.totalorder %s347, %s350
      %p359 = scmp.eq.s32.totalorder %s33, 3
      %p360 = por %p358, %p359
      %p361 = scmp.ne.s32.totalorder %s350, %s351
      %p362 = scmp.eq.s32.totalorder %s33, 0
      %p363 = por %p361, %p362
      %p364 = scmp.ne.s32.totalorder %s350, %s351
      %p365 = scmp.eq.s32.totalorder %s34, 3
      %p366 = por %p364, %p365
      %p368 = scmp.ne.s32.totalorder %s351, %s367
      %p369 = scmp.eq.s32.totalorder %s34, 0
      %p370 = por %p368, %p369
      %s371 = ssub.s32 %s36, %s43
      %p372 = scmp.eq.s32.totalorder %s371, 0
      %s374 = sadd.s32 %s373, 1
      %s375 = scalar_select %p372, %s373, %s374
      %p378 = pneg %p372
      %p379 = scmp.eq.s32.totalorder %s28, 3
      %p380 = por %p378, %p379
      %p381 = scmp.ne.s32.totalorder %s373, %s376
      %p382 = scmp.eq.s32.totalorder %s28, 0
      %p383 = por %p381, %p382
      %p384 = scmp.ne.s32.totalorder %s373, %s376
      %p385 = scmp.eq.s32.totalorder %s33, 3
      %p386 = por %p384, %p385
      %p387 = scmp.ne.s32.totalorder %s376, %s377
      %p388 = scmp.eq.s32.totalorder %s33, 0
      %p389 = por %p387, %p388
      %p390 = scmp.ne.s32.totalorder %s376, %s377
      %p391 = scmp.eq.s32.totalorder %s34, 3
      %p392 = por %p390, %p391
      %p394 = scmp.ne.s32.totalorder %s377, %s393
      %p395 = scmp.eq.s32.totalorder %s34, 0
      %p396 = por %p394, %p395
      %s397 = ssub.s32 %s36, %s43
      %p398 = scmp.eq.s32.totalorder %s397, 0
      %s400 = sadd.s32 %s399, 1
      %s401 = scalar_select %p398, %s399, %s400
      %p404 = pneg %p398
      %p405 = scmp.eq.s32.totalorder %s28, 3
      %p406 = por %p404, %p405
      %p407 = scmp.ne.s32.totalorder %s399, %s402
      %p408 = scmp.eq.s32.totalorder %s28, 0
      %p409 = por %p407, %p408
      %p410 = scmp.ne.s32.totalorder %s399, %s402
      %p411 = scmp.eq.s32.totalorder %s33, 3
      %p412 = por %p410, %p411
      %p413 = scmp.ne.s32.totalorder %s402, %s403
      %p414 = scmp.eq.s32.totalorder %s33, 0
      %p415 = por %p413, %p414
      %p416 = scmp.ne.s32.totalorder %s402, %s403
      %p417 = scmp.eq.s32.totalorder %s34, 3
      %p418 = por %p416, %p417
      %p420 = scmp.ne.s32.totalorder %s403, %s419
      %p421 = scmp.eq.s32.totalorder %s34, 0
      %p422 = por %p420, %p421
      %s423 = ssub.s32 %s36, %s43
      %p424 = scmp.eq.s32.totalorder %s423, 0
      %s426 = sadd.s32 %s425, 1
      %s427 = scalar_select %p424, %s425, %s426
      %p430 = pneg %p424
      %p431 = scmp.eq.s32.totalorder %s28, 3
      %p432 = por %p430, %p431
      %p433 = scmp.ne.s32.totalorder %s425, %s428
      %p434 = scmp.eq.s32.totalorder %s28, 0
      %p435 = por %p433, %p434
      %p436 = scmp.ne.s32.totalorder %s425, %s428
      %p437 = scmp.eq.s32.totalorder %s33, 3
      %p438 = por %p436, %p437
      %p439 = scmp.ne.s32.totalorder %s428, %s429
      %p440 = scmp.eq.s32.totalorder %s33, 0
      %p441 = por %p439, %p440
      %p442 = scmp.ne.s32.totalorder %s428, %s429
      %p443 = scmp.eq.s32.totalorder %s34, 3
      %p444 = por %p442, %p443
      %p446 = scmp.ne.s32.totalorder %s429, %s445
      %p447 = scmp.eq.s32.totalorder %s34, 0
      %p448 = por %p446, %p447
      %s450 = sadd.s32 %s449, 1
      %p453 = scmp.eq.s32.totalorder %s28, 3
      %p454 = scmp.ne.s32.totalorder %s449, %s451
      %p455 = scmp.eq.s32.totalorder %s28, 0
      %p456 = por %p454, %p455
      %p457 = scmp.ne.s32.totalorder %s449, %s451
      %p458 = scmp.eq.s32.totalorder %s33, 3
      %p459 = por %p457, %p458
      %p460 = scmp.ne.s32.totalorder %s451, %s452
      %p461 = scmp.eq.s32.totalorder %s33, 0
      %p462 = por %p460, %p461
      %p463 = scmp.ne.s32.totalorder %s451, %s452
      %p464 = scmp.eq.s32.totalorder %s34, 3
      %p465 = por %p463, %p464
      %p467 = scmp.ne.s32.totalorder %s452, %s466
      %p468 = scmp.eq.s32.totalorder %s34, 0
      %p469 = por %p467, %p468
      %s471 = sadd.s32 %s470, 1
      %p474 = scmp.eq.s32.totalorder %s28, 3
      %p475 = scmp.ne.s32.totalorder %s470, %s472
      %p476 = scmp.eq.s32.totalorder %s28, 0
      %p477 = por %p475, %p476
      %p478 = scmp.ne.s32.totalorder %s470, %s472
      %p479 = scmp.eq.s32.totalorder %s33, 3
      %p480 = por %p478, %p479
      %p481 = scmp.ne.s32.totalorder %s472, %s473
      %p482 = scmp.eq.s32.totalorder %s33, 0
      %p483 = por %p481, %p482
      %p484 = scmp.ne.s32.totalorder %s472, %s473
      %p485 = scmp.eq.s32.totalorder %s34, 3
      %p486 = por %p484, %p485
      %p488 = scmp.ne.s32.totalorder %s473, %s487
      %p489 = scmp.eq.s32.totalorder %s34, 0
      %p490 = por %p488, %p489
      %s492 = sadd.s32 %s491, 1
      %p495 = scmp.eq.s32.totalorder %s28, 3
      %p496 = scmp.ne.s32.totalorder %s491, %s493
      %p497 = scmp.eq.s32.totalorder %s28, 0
      %p498 = por %p496, %p497
      %p499 = scmp.ne.s32.totalorder %s491, %s493
      %p500 = scmp.eq.s32.totalorder %s33, 3
      %p501 = por %p499, %p500
      %p502 = scmp.ne.s32.totalorder %s493, %s494
      %p503 = scmp.eq.s32.totalorder %s33, 0
      %p504 = por %p502, %p503
      %p505 = scmp.ne.s32.totalorder %s493, %s494
      %p506 = scmp.eq.s32.totalorder %s34, 3
      %p507 = por %p505, %p506
      %p509 = scmp.ne.s32.totalorder %s494, %s508
      %p510 = scmp.eq.s32.totalorder %s34, 0
      %p511 = por %p509, %p510
      %s512 = ssub.s32 %s35, %s47
      %p513 = scmp.eq.s32.totalorder %s512, 0
      %s515 = sadd.s32 %s514, 1
      %s516 = scalar_select %p513, %s514, %s515
      %p519 = pneg %p513
      %p520 = scmp.eq.s32.totalorder %s28, 3
      %p521 = por %p519, %p520
      %p522 = scmp.ne.s32.totalorder %s514, %s517
      %p523 = scmp.eq.s32.totalorder %s28, 0
      %p524 = por %p522, %p523
      %p525 = scmp.ne.s32.totalorder %s514, %s517
      %p526 = scmp.eq.s32.totalorder %s33, 3
      %p527 = por %p525, %p526
      %p528 = scmp.ne.s32.totalorder %s517, %s518
      %p529 = scmp.eq.s32.totalorder %s33, 0
      %p530 = por %p528, %p529
      %p531 = scmp.ne.s32.totalorder %s517, %s518
      %p532 = scmp.eq.s32.totalorder %s34, 3
      %p533 = por %p531, %p532
      %p535 = scmp.ne.s32.totalorder %s518, %s534
      %p536 = scmp.eq.s32.totalorder %s34, 0
      %p537 = por %p535, %p536
      %p538 = scmp.le.s32.totalorder 1, %s28
      %p539 = scmp.lt.s32.totalorder %s28, 5
      %p540 = pnand %p538, %p539
      %p541 = pneg %p540
      // Predicated region
      $region9: #{idea_predictor_forward.1} parent=5 // pred_check
        _
      $region10: #{idea_predictor_forward.1} parent=5 // pred_check_branch
        %543 = sbr.rel (%p540) target = $region12
      $region11: #{idea_predictor_forward.1} parent=5 // pred_region
        %s544 = ssub.s32 %s28, 1
        // Predicated region
        $region13: #{idea_predictor_forward.1} parent=11 // pred_check
          %p545 = pneg %p87
        $region14: #{idea_predictor_forward.1} parent=11 // pred_check_branch
          %547 = sbr.rel (%p545) target = $region16
        $region15: #{idea_predictor_forward.1} parent=11 // pred_region
          _
        $region16: #{idea_predictor_forward.1} parent=11 // pred_fallthru
          _
        // Predicated region
        $region17: #{idea_predictor_forward.1} parent=11 // pred_check
          %p548 = pneg %p108
        $region18: #{idea_predictor_forward.1} parent=11 // pred_check_branch
          %550 = sbr.rel (%p548) target = $region20
        $region19: #{idea_predictor_forward.1} parent=11 // pred_region
          _
        $region20: #{idea_predictor_forward.1} parent=11 // pred_fallthru
          _
        // Predicated region
        $region21: #{idea_predictor_forward.1} parent=11 // pred_check
          %p551 = pneg %p129
        $region22: #{idea_predictor_forward.1} parent=11 // pred_check_branch
          %553 = sbr.rel (%p551) target = $region24
        $region23: #{idea_predictor_forward.1} parent=11 // pred_region
          _
        $region24: #{idea_predictor_forward.1} parent=11 // pred_fallthru
          _
        // Predicated region
        $region25: #{idea_predictor_forward.1} parent=11 // pred_check
          %p554 = pneg %p462
        $region26: #{idea_predictor_forward.1} parent=11 // pred_check_branch
          %556 = sbr.rel (%p554) target = $region28
        $region27: #{idea_predictor_forward.1} parent=11 // pred_region
          _
        $region28: #{idea_predictor_forward.1} parent=11 // pred_fallthru
          _
        // Predicated region
        $region29: #{idea_predictor_forward.1} parent=11 // pred_check
          %p557 = pneg %p483
        $region30: #{idea_predictor_forward.1} parent=11 // pred_check_branch
          %559 = sbr.rel (%p557) target = $region32
        $region31: #{idea_predictor_forward.1} parent=11 // pred_region
          _
        $region32: #{idea_predictor_forward.1} parent=11 // pred_fallthru
          _
        // Predicated region
        $region33: #{idea_predictor_forward.1} parent=11 // pred_check
          %p560 = pneg %p504
        $region34: #{idea_predictor_forward.1} parent=11 // pred_check_branch
          %562 = sbr.rel (%p560) target = $region36
        $region35: #{idea_predictor_forward.1} parent=11 // pred_region
          _
        $region36: #{idea_predictor_forward.1} parent=11 // pred_fallthru
          _
      $region12: #{idea_predictor_forward.1} parent=5 // pred_fallthru
        _
      %p563 = scmp.lt.s32.totalorder %s28, 4
      // Predicated region
      $region37: #{idea_predictor_forward.1} parent=5 // pred_check
        %p564 = pneg %p563
      $region38: #{idea_predictor_forward.1} parent=5 // pred_check_branch
        %566 = sbr.rel (%p564) target = $region40
      $region39: #{idea_predictor_forward.1} parent=5 // pred_region
        // Predicated region
        $region41: #{idea_predictor_forward.1} parent=39 // pred_check
          %p567 = pneg %p60
        $region42: #{idea_predictor_forward.1} parent=39 // pred_check_branch
          %569 = sbr.rel (%p567) target = $region44
        $region43: #{idea_predictor_forward.1} parent=39 // pred_region
          %p570 = scmp.lt.s32.totalorder %s35, 1
          %s571 = scalar_select %p570, %s35, 1
          %s572 = smul.addr %s571, 2
          %s573 = smul.addr %s572, 8
          %s574 = scalar_lea.vmem %s0, %s573
        $region44: #{idea_predictor_forward.1} parent=39 // pred_fallthru
          _
        // Predicated region
        $region45: #{idea_predictor_forward.1} parent=39 // pred_check
          %p575 = pneg %p149
        $region46: #{idea_predictor_forward.1} parent=39 // pred_check_branch
          %577 = sbr.rel (%p575) target = $region48
        $region47: #{idea_predictor_forward.1} parent=39 // pred_region
          %p578 = scmp.lt.s32.totalorder %s36, 1
          %s579 = scalar_select %p578, %s36, 1
          %s580 = scalar_lea.vmem %s4, %s579
        $region48: #{idea_predictor_forward.1} parent=39 // pred_fallthru
          _
        // Predicated region
        $region49: #{idea_predictor_forward.1} parent=39 // pred_check
          %p581 = pneg %p175
        $region50: #{idea_predictor_forward.1} parent=39 // pred_check_branch
          %583 = sbr.rel (%p581) target = $region52
        $region51: #{idea_predictor_forward.1} parent=39 // pred_region
          %p584 = scmp.lt.s32.totalorder %s36, 1
          %s585 = scalar_select %p584, %s36, 1
          %s586 = scalar_lea.vmem %s5, %s585
        $region52: #{idea_predictor_forward.1} parent=39 // pred_fallthru
          _
        // Predicated region
        $region53: #{idea_predictor_forward.1} parent=39 // pred_check
          %p587 = pneg %p201
        $region54: #{idea_predictor_forward.1} parent=39 // pred_check_branch
          %589 = sbr.rel (%p587) target = $region56
        $region55: #{idea_predictor_forward.1} parent=39 // pred_region
          %p590 = scmp.lt.s32.totalorder %s36, 1
          %s591 = scalar_select %p590, %s36, 1
          %s592 = smul.addr %s591, 48
          %s593 = smul.addr %s592, 4
          %s594 = scalar_lea.vmem %s6, %s593
        $region56: #{idea_predictor_forward.1} parent=39 // pred_fallthru
          _
        // Predicated region
        $region57: #{idea_predictor_forward.1} parent=39 // pred_check
          %p595 = pneg %p227
        $region58: #{idea_predictor_forward.1} parent=39 // pred_check_branch
          %597 = sbr.rel (%p595) target = $region60
        $region59: #{idea_predictor_forward.1} parent=39 // pred_region
          %p598 = scmp.lt.s32.totalorder %s36, 1
          %s599 = scalar_select %p598, %s36, 1
          %s600 = smul.addr %s599, 3
          %s601 = scalar_lea.vmem %s7, %s600
        $region60: #{idea_predictor_forward.1} parent=39 // pred_fallthru
          _
        // Predicated region
        $region61: #{idea_predictor_forward.1} parent=39 // pred_check
          %p602 = pneg %p253
        $region62: #{idea_predictor_forward.1} parent=39 // pred_check_branch
          %604 = sbr.rel (%p602) target = $region64
        $region63: #{idea_predictor_forward.1} parent=39 // pred_region
          %p605 = scmp.lt.s32.totalorder %s36, 1
          %s606 = scalar_select %p605, %s36, 1
          %s607 = smul.addr %s606, 16
          %s608 = smul.addr %s607, 4
          %s609 = scalar_lea.vmem %s8, %s608
        $region64: #{idea_predictor_forward.1} parent=39 // pred_fallthru
          _
        // Predicated region
        $region65: #{idea_predictor_forward.1} parent=39 // pred_check
          %p610 = pneg %p279
        $region66: #{idea_predictor_forward.1} parent=39 // pred_check_branch
          %612 = sbr.rel (%p610) target = $region68
        $region67: #{idea_predictor_forward.1} parent=39 // pred_region
          %p613 = scmp.lt.s32.totalorder %s36, 1
          %s614 = scalar_select %p613, %s36, 1
          %s615 = scalar_lea.vmem %s9, %s614
        $region68: #{idea_predictor_forward.1} parent=39 // pred_fallthru
          _
        // Predicated region
        $region69: #{idea_predictor_forward.1} parent=39 // pred_check
          %p616 = pneg %p305
        $region70: #{idea_predictor_forward.1} parent=39 // pred_check_branch
          %618 = sbr.rel (%p616) target = $region72
        $region71: #{idea_predictor_forward.1} parent=39 // pred_region
          %p619 = scmp.lt.s32.totalorder %s36, 1
          %s620 = scalar_select %p619, %s36, 1
          %s621 = scalar_lea.vmem %s10, %s620
        $region72: #{idea_predictor_forward.1} parent=39 // pred_fallthru
          _
        // Predicated region
        $region73: #{idea_predictor_forward.1} parent=39 // pred_check
          %p622 = pneg %p331
        $region74: #{idea_predictor_forward.1} parent=39 // pred_check_branch
          %624 = sbr.rel (%p622) target = $region76
        $region75: #{idea_predictor_forward.1} parent=39 // pred_region
          %p625 = scmp.lt.s32.totalorder %s36, 1
          %s626 = scalar_select %p625, %s36, 1
          %s627 = scalar_lea.vmem %s11, %s626
        $region76: #{idea_predictor_forward.1} parent=39 // pred_fallthru
          _
        // Predicated region
        $region77: #{idea_predictor_forward.1} parent=39 // pred_check
          %p628 = pneg %p357
        $region78: #{idea_predictor_forward.1} parent=39 // pred_check_branch
          %630 = sbr.rel (%p628) target = $region80
        $region79: #{idea_predictor_forward.1} parent=39 // pred_region
          %p631 = scmp.lt.s32.totalorder %s36, 1
          %s632 = scalar_select %p631, %s36, 1
          %s633 = smul.addr %s632, 64
          %s634 = smul.addr %s633, 4
          %s635 = scalar_lea.vmem %s12, %s634
        $region80: #{idea_predictor_forward.1} parent=39 // pred_fallthru
          _
        // Predicated region
        $region81: #{idea_predictor_forward.1} parent=39 // pred_check
          %p636 = pneg %p383
        $region82: #{idea_predictor_forward.1} parent=39 // pred_check_branch
          %638 = sbr.rel (%p636) target = $region84
        $region83: #{idea_predictor_forward.1} parent=39 // pred_region
          %p639 = scmp.lt.s32.totalorder %s36, 1
          %s640 = scalar_select %p639, %s36, 1
          %s641 = smul.addr %s640, 4
          %s642 = scalar_lea.vmem %s13, %s641
        $region84: #{idea_predictor_forward.1} parent=39 // pred_fallthru
          _
        // Predicated region
        $region85: #{idea_predictor_forward.1} parent=39 // pred_check
          %p643 = pneg %p409
        $region86: #{idea_predictor_forward.1} parent=39 // pred_check_branch
          %645 = sbr.rel (%p643) target = $region88
        $region87: #{idea_predictor_forward.1} parent=39 // pred_region
          %p646 = scmp.lt.s32.totalorder %s36, 1
          %s647 = scalar_select %p646, %s36, 1
          %s648 = smul.addr %s647, 64
          %s649 = smul.addr %s648, 4
          %s650 = scalar_lea.vmem %s14, %s649
        $region88: #{idea_predictor_forward.1} parent=39 // pred_fallthru
          _
        // Predicated region
        $region89: #{idea_predictor_forward.1} parent=39 // pred_check
          %p651 = pneg %p435
        $region90: #{idea_predictor_forward.1} parent=39 // pred_check_branch
          %653 = sbr.rel (%p651) target = $region92
        $region91: #{idea_predictor_forward.1} parent=39 // pred_region
          %p654 = scmp.lt.s32.totalorder %s36, 1
          %s655 = scalar_select %p654, %s36, 1
          %s656 = scalar_lea.vmem %s15, %s655
        $region92: #{idea_predictor_forward.1} parent=39 // pred_fallthru
          _
      $region40: #{idea_predictor_forward.1} parent=5 // pred_fallthru
        _
      %p657 = scmp.le.s32.totalorder 1, %s28
      %p658 = scmp.lt.s32.totalorder %s28, 5
      %p659 = pnand %p657, %p658
      %p660 = pneg %p659
      // Predicated region
      $region93: #{idea_predictor_forward.1} parent=5 // pred_check
        _
      $region94: #{idea_predictor_forward.1} parent=5 // pred_check_branch
        %662 = sbr.rel (%p659) target = $region96
      $region95: #{idea_predictor_forward.1} parent=5 // pred_region
        %s663 = ssub.s32 %s28, 1
        %p664 = scmp.lt.s32.totalorder %s37, 1
        %s665 = scalar_select %p664, %s37, 1
        %s666 = smul.addr %s665, 2
        %s667 = smul.addr %s666, 8
        %s668 = scalar_lea.vmem %s0, %s667
        %p669 = pneg %p66
        %p670 = pneg %p63
        %p671 = pneg %p87
        %p672 = pneg %p84
        %p673 = pneg %p108
        %p674 = pneg %p105
        %p675 = pneg %p129
        %p676 = pneg %p126
        %p677 = scmp.lt.s32.totalorder %s38, 1
        %s678 = scalar_select %p677, %s38, 1
        %s679 = scalar_lea.vmem %s4, %s678
        %p680 = pneg %p155
        %p681 = pneg %p152
        %p682 = scmp.lt.s32.totalorder %s38, 1
        %s683 = scalar_select %p682, %s38, 1
        %s684 = scalar_lea.vmem %s5, %s683
        %p685 = pneg %p181
        %p686 = pneg %p178
        %p687 = scmp.lt.s32.totalorder %s38, 1
        %s688 = scalar_select %p687, %s38, 1
        %s689 = smul.addr %s688, 48
        %s690 = smul.addr %s689, 4
        %s691 = scalar_lea.vmem %s6, %s690
        %p692 = pneg %p207
        %p693 = pneg %p204
        %p694 = scmp.lt.s32.totalorder %s38, 1
        %s695 = scalar_select %p694, %s38, 1
        %s696 = smul.addr %s695, 3
        %s697 = scalar_lea.vmem %s7, %s696
        %p698 = pneg %p233
        %p699 = pneg %p230
        %p700 = scmp.lt.s32.totalorder %s38, 1
        %s701 = scalar_select %p700, %s38, 1
        %s702 = smul.addr %s701, 16
        %s703 = smul.addr %s702, 4
        %s704 = scalar_lea.vmem %s8, %s703
        %p705 = pneg %p259
        %p706 = pneg %p256
        %p707 = scmp.lt.s32.totalorder %s38, 1
        %s708 = scalar_select %p707, %s38, 1
        %s709 = scalar_lea.vmem %s9, %s708
        %p710 = pneg %p285
        %p711 = pneg %p282
        %p712 = scmp.lt.s32.totalorder %s38, 1
        %s713 = scalar_select %p712, %s38, 1
        %s714 = scalar_lea.vmem %s10, %s713
        %p715 = pneg %p311
        %p716 = pneg %p308
        %p717 = scmp.lt.s32.totalorder %s38, 1
        %s718 = scalar_select %p717, %s38, 1
        %s719 = scalar_lea.vmem %s11, %s718
        %p720 = pneg %p337
        %p721 = pneg %p334
        %p722 = scmp.lt.s32.totalorder %s38, 1
        %s723 = scalar_select %p722, %s38, 1
        %s724 = smul.addr %s723, 64
        %s725 = smul.addr %s724, 4
        %s726 = scalar_lea.vmem %s12, %s725
        %p727 = pneg %p363
        %p728 = pneg %p360
        %p729 = scmp.lt.s32.totalorder %s38, 1
        %s730 = scalar_select %p729, %s38, 1
        %s731 = smul.addr %s730, 4
        %s732 = scalar_lea.vmem %s13, %s731
        %p733 = pneg %p389
        %p734 = pneg %p386
        %p735 = scmp.lt.s32.totalorder %s38, 1
        %s736 = scalar_select %p735, %s38, 1
        %s737 = smul.addr %s736, 64
        %s738 = smul.addr %s737, 4
        %s739 = scalar_lea.vmem %s14, %s738
        %p740 = pneg %p415
        %p741 = pneg %p412
        %p742 = scmp.lt.s32.totalorder %s38, 1
        %s743 = scalar_select %p742, %s38, 1
        %s744 = scalar_lea.vmem %s15, %s743
        %p745 = pneg %p441
        %p746 = pneg %p438
        %p747 = pneg %p462
        %p748 = pneg %p459
        %p749 = pneg %p483
        %p750 = pneg %p480
        %p751 = pneg %p504
        %p752 = pneg %p501
        %p753 = pneg %p530
        %p754 = pneg %p527
        %s755 = sand.u32 %s517, 1
        %s756 = scalar_lea.sflag [#allocation4], %s755
        %s757 = sand.u32 %s517, 1
        %s758 = smul.addr %s757, 16
        %s759 = scalar_lea.vmem [#allocation3], %s758
        %p760 = scmp.lt.s32.totalorder %s37, 1
        %s761 = scalar_select %p760, %s37, 1
        %s762 = smul.addr %s761, 2
        %s763 = smul.addr %s762, 8
        %s764 = scalar_lea.vmem %s0, %s763
        %p765 = scmp.lt.s32.totalorder %s38, 1
        %s766 = scalar_select %p765, %s38, 1
        %s767 = scalar_lea.vmem %s4, %s766
        %p768 = scmp.lt.s32.totalorder %s38, 1
        %s769 = scalar_select %p768, %s38, 1
        %s770 = scalar_lea.vmem %s5, %s769
        %p771 = scmp.lt.s32.totalorder %s38, 1
        %s772 = scalar_select %p771, %s38, 1
        %s773 = smul.addr %s772, 48
        %s774 = smul.addr %s773, 4
        %s775 = scalar_lea.vmem %s6, %s774
        %p776 = scmp.lt.s32.totalorder %s38, 1
        %s777 = scalar_select %p776, %s38, 1
        %s778 = smul.addr %s777, 3
        %s779 = scalar_lea.vmem %s7, %s778
        %p780 = scmp.lt.s32.totalorder %s38, 1
        %s781 = scalar_select %p780, %s38, 1
        %s782 = smul.addr %s781, 16
        %s783 = smul.addr %s782, 4
        %s784 = scalar_lea.vmem %s8, %s783
        %p785 = scmp.lt.s32.totalorder %s38, 1
        %s786 = scalar_select %p785, %s38, 1
        %s787 = scalar_lea.vmem %s9, %s786
        %p788 = scmp.lt.s32.totalorder %s38, 1
        %s789 = scalar_select %p788, %s38, 1
        %s790 = scalar_lea.vmem %s10, %s789
        %p791 = scmp.lt.s32.totalorder %s38, 1
        %s792 = scalar_select %p791, %s38, 1
        %s793 = scalar_lea.vmem %s11, %s792
        %p794 = scmp.lt.s32.totalorder %s38, 1
        %s795 = scalar_select %p794, %s38, 1
        %s796 = smul.addr %s795, 64
        %s797 = smul.addr %s796, 4
        %s798 = scalar_lea.vmem %s12, %s797
        %p799 = scmp.lt.s32.totalorder %s38, 1
        %s800 = scalar_select %p799, %s38, 1
        %s801 = smul.addr %s800, 4
        %s802 = scalar_lea.vmem %s13, %s801
        %p803 = scmp.lt.s32.totalorder %s38, 1
        %s804 = scalar_select %p803, %s38, 1
        %s805 = smul.addr %s804, 64
        %s806 = smul.addr %s805, 4
        %s807 = scalar_lea.vmem %s14, %s806
        %p808 = scmp.lt.s32.totalorder %s38, 1
        %s809 = scalar_select %p808, %s38, 1
        %s810 = scalar_lea.vmem %s15, %s809
        %p812 = scmp.eq.s32.totalorder %s38, 0
        // Predicated region
        $region97: #{idea_predictor_forward.1} parent=95 // pred_check
          %p813 = pneg %p812
        $region98: #{idea_predictor_forward.1} parent=95 // pred_check_branch
          %815 = sbr.rel (%p813) target = $region100
        $region99: #{idea_predictor_forward.1} parent=95 // pred_region
          %v816 = vld [vmem:[%s764] sm:$0xff]
          %v817 = vld [vmem:[%s764 + $0x8] sm:$0xff]
          %v818 = vpack.c.bf16 %v816, %v816
          %v819 = vpack.c.bf16 %v817, %v817
          %v820 = vld [vmem:[%s1] sm:$0xf]
          %v821 = vld [vmem:[%s1 + $0x4] sm:$0xf]
          %v822 = vld [vmem:[%s1 + $0x8] sm:$0xf]
          %v823 = vld [vmem:[%s1 + $0xc] sm:$0xf]
          %v824 = vld [vmem:[%s1 + $0x10] sm:$0xf]
          %v825 = vld [vmem:[%s1 + $0x14] sm:$0xf]
          %v826 = vld [vmem:[%s1 + $0x18] sm:$0xf]
          %v827 = vld [vmem:[%s1 + $0x1c] sm:$0xf]
          %v828 = vld [vmem:[%s1 + $0x20] sm:$0xf]
          %v829 = vld [vmem:[%s1 + $0x24] sm:$0xf]
          %v830 = vld [vmem:[%s1 + $0x28] sm:$0xf]
          %v831 = vld [vmem:[%s1 + $0x2c] sm:$0xf]
          %v832 = vld [vmem:[%s1 + $0x30] sm:$0xf]
          %v833 = vld [vmem:[%s1 + $0x34] sm:$0xf]
          %v834 = vld [vmem:[%s1 + $0x38] sm:$0xf]
          %v835 = vld [vmem:[%s1 + $0x3c] sm:$0xf]
          %v836 = vld [vmem:[%s1 + $0x40] sm:$0xf]
          %v837 = vld [vmem:[%s1 + $0x44] sm:$0xf]
          %v838 = vld [vmem:[%s1 + $0x48] sm:$0xf]
          %v839 = vld [vmem:[%s1 + $0x4c] sm:$0xf]
          %v840 = vld [vmem:[%s1 + $0x50] sm:$0xf]
          %v841 = vld [vmem:[%s1 + $0x54] sm:$0xf]
          %v842 = vld [vmem:[%s1 + $0x58] sm:$0xf]
          %v843 = vld [vmem:[%s1 + $0x5c] sm:$0xf]
          %v844 = vld [vmem:[%s1 + $0x60] sm:$0xf]
          %v845 = vld [vmem:[%s1 + $0x64] sm:$0xf]
          %v846 = vld [vmem:[%s1 + $0x68] sm:$0xf]
          %v847 = vld [vmem:[%s1 + $0x6c] sm:$0xf]
          %v848 = vld [vmem:[%s1 + $0x70] sm:$0xf]
          %v849 = vld [vmem:[%s1 + $0x74] sm:$0xf]
          %v850 = vld [vmem:[%s1 + $0x78] sm:$0xf]
          %v851 = vld [vmem:[%s1 + $0x7c] sm:$0xf]
          %v852 = vld [vmem:[%s2] sm:$0xff]
          %v885 = vunpack.c.l.b16 %v820
          %v886 = vunpack.c.l.b16 %v821
          %v887 = vunpack.c.l.b16 %v822
          %v888 = vunpack.c.l.b16 %v823
          %v889 = vunpack.c.l.b16 %v824
          %v890 = vunpack.c.l.b16 %v825
          %v891 = vunpack.c.l.b16 %v826
          %v892 = vunpack.c.l.b16 %v827
          %v893 = vunpack.c.l.b16 %v828
          %v894 = vunpack.c.l.b16 %v829
          %v895 = vunpack.c.l.b16 %v830
          %v896 = vunpack.c.l.b16 %v831
          %v897 = vunpack.c.l.b16 %v832
          %v898 = vunpack.c.l.b16 %v833
          %v899 = vunpack.c.l.b16 %v834
          %v900 = vunpack.c.l.b16 %v835
          %v901 = vunpack.c.l.b16 %v836
          %v902 = vunpack.c.l.b16 %v837
          %v903 = vunpack.c.l.b16 %v838
          %v904 = vunpack.c.l.b16 %v839
          %v905 = vunpack.c.l.b16 %v840
          %v906 = vunpack.c.l.b16 %v841
          %v907 = vunpack.c.l.b16 %v842
          %v908 = vunpack.c.l.b16 %v843
          %v909 = vunpack.c.l.b16 %v844
          %v910 = vunpack.c.l.b16 %v845
          %v911 = vunpack.c.l.b16 %v846
          %v912 = vunpack.c.l.b16 %v847
          %v913 = vunpack.c.l.b16 %v848
          %v914 = vunpack.c.l.b16 %v849
          %v915 = vunpack.c.l.b16 %v850
          %v916 = vunpack.c.l.b16 %v851
          %v917 = vpack.c.b16 %v886, %v885
          %v918 = vpack.c.b16 %v888, %v887
          %v919 = vpack.c.b16 %v890, %v889
          %v920 = vpack.c.b16 %v892, %v891
          %v921 = vpack.c.b16 %v894, %v893
          %v922 = vpack.c.b16 %v896, %v895
          %v923 = vpack.c.b16 %v898, %v897
          %v924 = vpack.c.b16 %v900, %v899
          %v925 = vpack.c.b16 %v902, %v901
          %v926 = vpack.c.b16 %v904, %v903
          %v927 = vpack.c.b16 %v906, %v905
          %v928 = vpack.c.b16 %v908, %v907
          %v929 = vpack.c.b16 %v910, %v909
          %v930 = vpack.c.b16 %v912, %v911
          %v931 = vpack.c.b16 %v914, %v913
          %v932 = vpack.c.b16 %v916, %v915
          %949 = vmatpush.bf16.msra.mxu0 %v924
          %950 = vmatpush.bf16.msra.mxu0 %v923
          %951 = vmatpush.bf16.msra.mxu0 %v922
          %952 = vmatpush.bf16.msra.mxu0 %v921
          %953 = vmatpush.bf16.msra.mxu0 %v920
          %954 = vmatpush.bf16.msra.mxu0 %v919
          %955 = vmatpush.bf16.msra.mxu0 %v918
          %956 = vmatpush.bf16.msra.mxu0 %v917
          %957 = vmatmul.bf16.gmra.mxu0 %v818
          %v958 = vpop.f32.mrf.mxu0
          %v959 = vadd.f32 %v852, %v958
          %v960 = vpop.f32.mrf.mxu0
          %961 = vdwg.mxu0
          %962 = vmatpush.bf16.msra.mxu0 %v932
          %963 = vmatpush.bf16.msra.mxu0 %v931
          %964 = vmatpush.bf16.msra.mxu0 %v930
          %965 = vmatpush.bf16.msra.mxu0 %v929
          %966 = vmatpush.bf16.msra.mxu0 %v928
          %967 = vmatpush.bf16.msra.mxu0 %v927
          %968 = vmatpush.bf16.msra.mxu0 %v926
          %969 = vmatpush.bf16.msra.mxu0 %v925
          %970 = vmatmul.bf16.gmra.mxu0 %v819
          %v971 = vpop.f32.mrf.mxu0
          %v972 = vadd.f32 %v959, %v971
          %v973 = vpop.f32.mrf.mxu0
          %974 = vdwg.mxu0
          %975 = vst [vmem:[#allocation2] sm:$0xff] %v972
        $region100: #{idea_predictor_forward.1} parent=95 // pred_fallthru
          _
        %v976 = vld [vmem:[#allocation2] sm:$0xff]
        %v977 = vld [vmem:[%s767] sm:$0x1]
        %v978 = vld [vmem:[%s770] sm:$0x1]
        %979 = vadd.xlane.f32.xlu0 %v976
        %v980 = vpop.xlane.xlu0 %979
        %v981 = vrcp.pop 128.0
        %v982 = vmul.f32 128.0, %v981
        %v983 = vsub.f32 1.0, %v982
        %v984 = vmul.f32 %v981, %v983
        %v985 = vadd.f32 %v981, %v984
        %vm986 = vweird.f32 %v981
        %v987 = vsel %vm986, %v981, %v985
        %v988 = vmul.f32 %v980, %v987
        %v989 = vsub.f32 %v976, %v988
        %v990 = vmul.f32 %v989, %v989
        %991 = vadd.xlane.f32.xlu0 %v990
        %v992 = vpop.xlane.xlu0 %991
        %v993 = vmul.f32 %v992, %v987
        %v994 = vadd.f32 %v993, 1e-05
        %v995 = vrsqrt.pop %v994
        %v996 = vmul.f32 %v995, %v994
        %v997 = vmul.f32 %v996, %v995
        %v998 = vmul.f32 0.5, %v997
        %v999 = vsub.f32 1.5, %v998
        %v1000 = vmul.f32 %v995, %v999
        %vm1001 = vweird.f32 %v994
        %vm1002 = vweird.f32 %v995
        %vm1003 = vmor %vm1001, %vm1002
        %v1004 = vsel %vm1003, %v995, %v1000
        %v1005 = vmul.f32 %v989, %v1004
        %v1007 = vperm.slane %v977, 0
        %v1009 = vmul.f32 %v1005, %v1007
        %v1011 = vperm.slane %v978, 0
        %v1013 = vadd.f32 %v1009, %v1011
        %v1014 = vpack.c.bf16 %v1013, %v1013
        %v1015 = vld [vmem:[%s775] sm:$0xff]
        %v1016 = vld [vmem:[%s775 + $0x8] sm:$0xf]
        %v1017 = vld [vmem:[%s775 + $0xc] sm:$0xff]
        %v1018 = vld [vmem:[%s775 + $0x14] sm:$0xf]
        %v1019 = vld [vmem:[%s775 + $0x18] sm:$0xff]
        %v1020 = vld [vmem:[%s775 + $0x20] sm:$0xf]
        %v1021 = vld [vmem:[%s775 + $0x24] sm:$0xff]
        %v1022 = vld [vmem:[%s775 + $0x2c] sm:$0xf]
        %v1023 = vld [vmem:[%s775 + $0x30] sm:$0xff]
        %v1024 = vld [vmem:[%s775 + $0x38] sm:$0xf]
        %v1025 = vld [vmem:[%s775 + $0x3c] sm:$0xff]
        %v1026 = vld [vmem:[%s775 + $0x44] sm:$0xf]
        %v1027 = vld [vmem:[%s775 + $0x48] sm:$0xff]
        %v1028 = vld [vmem:[%s775 + $0x50] sm:$0xf]
        %v1029 = vld [vmem:[%s775 + $0x54] sm:$0xff]
        %v1030 = vld [vmem:[%s775 + $0x5c] sm:$0xf]
        %v1031 = vld [vmem:[%s775 + $0x60] sm:$0xff]
        %v1032 = vld [vmem:[%s775 + $0x68] sm:$0xf]
        %v1033 = vld [vmem:[%s775 + $0x6c] sm:$0xff]
        %v1034 = vld [vmem:[%s775 + $0x74] sm:$0xf]
        %v1035 = vld [vmem:[%s775 + $0x78] sm:$0xff]
        %v1036 = vld [vmem:[%s775 + $0x80] sm:$0xf]
        %v1037 = vld [vmem:[%s775 + $0x84] sm:$0xff]
        %v1038 = vld [vmem:[%s775 + $0x8c] sm:$0xf]
        %v1039 = vld [vmem:[%s775 + $0x90] sm:$0xff]
        %v1040 = vld [vmem:[%s775 + $0x98] sm:$0xf]
        %v1041 = vld [vmem:[%s775 + $0x9c] sm:$0xff]
        %v1042 = vld [vmem:[%s775 + $0xa4] sm:$0xf]
        %v1043 = vld [vmem:[%s775 + $0xa8] sm:$0xff]
        %v1044 = vld [vmem:[%s775 + $0xb0] sm:$0xf]
        %v1045 = vld [vmem:[%s775 + $0xb4] sm:$0xff]
        %v1046 = vld [vmem:[%s775 + $0xbc] sm:$0xf]
        %v1047 = vld [vmem:[%s779] sm:$0x7]
        %v1049 = vperm.slane %v1047, 0
        %v1050 = vperm.slane %v1047, 1
        %v1051 = vperm.slane %v1047, 2
        %v1087 = vunpack.c.l.b16 %v1015
        %v1088 = vunpack.c.h.b16 %v1015
        %v1089 = vunpack.c.l.b16 %v1016
        %v1090 = vunpack.c.l.b16 %v1017
        %v1091 = vunpack.c.h.b16 %v1017
        %v1092 = vunpack.c.l.b16 %v1018
        %v1093 = vunpack.c.l.b16 %v1019
        %v1094 = vunpack.c.h.b16 %v1019
        %v1095 = vunpack.c.l.b16 %v1020
        %v1096 = vunpack.c.l.b16 %v1021
        %v1097 = vunpack.c.h.b16 %v1021
        %v1098 = vunpack.c.l.b16 %v1022
        %v1099 = vunpack.c.l.b16 %v1023
        %v1100 = vunpack.c.h.b16 %v1023
        %v1101 = vunpack.c.l.b16 %v1024
        %v1102 = vunpack.c.l.b16 %v1025
        %v1103 = vunpack.c.h.b16 %v1025
        %v1104 = vunpack.c.l.b16 %v1026
        %v1105 = vunpack.c.l.b16 %v1027
        %v1106 = vunpack.c.h.b16 %v1027
        %v1107 = vunpack.c.l.b16 %v1028
        %v1108 = vunpack.c.l.b16 %v1029
        %v1109 = vunpack.c.h.b16 %v1029
        %v1110 = vunpack.c.l.b16 %v1030
        %v1111 = vunpack.c.l.b16 %v1031
        %v1112 = vunpack.c.h.b16 %v1031
        %v1113 = vunpack.c.l.b16 %v1032
        %v1114 = vunpack.c.l.b16 %v1033
        %v1115 = vunpack.c.h.b16 %v1033
        %v1116 = vunpack.c.l.b16 %v1034
        %v1117 = vunpack.c.l.b16 %v1035
        %v1118 = vunpack.c.h.b16 %v1035
        %v1119 = vunpack.c.l.b16 %v1036
        %v1120 = vunpack.c.l.b16 %v1037
        %v1121 = vunpack.c.h.b16 %v1037
        %v1122 = vunpack.c.l.b16 %v1038
        %v1123 = vunpack.c.l.b16 %v1039
        %v1124 = vunpack.c.h.b16 %v1039
        %v1125 = vunpack.c.l.b16 %v1040
        %v1126 = vunpack.c.l.b16 %v1041
        %v1127 = vunpack.c.h.b16 %v1041
        %v1128 = vunpack.c.l.b16 %v1042
        %v1129 = vunpack.c.l.b16 %v1043
        %v1130 = vunpack.c.h.b16 %v1043
        %v1131 = vunpack.c.l.b16 %v1044
        %v1132 = vunpack.c.l.b16 %v1045
        %v1133 = vunpack.c.h.b16 %v1045
        %v1134 = vunpack.c.l.b16 %v1046
        %v1135 = vpack.c.b16 %v1090, %v1087
        %v1136 = vpack.c.b16 %v1091, %v1088
        %v1137 = vpack.c.b16 %v1092, %v1089
        %v1138 = vpack.c.b16 %v1096, %v1093
        %v1139 = vpack.c.b16 %v1097, %v1094
        %v1140 = vpack.c.b16 %v1098, %v1095
        %v1141 = vpack.c.b16 %v1102, %v1099
        %v1142 = vpack.c.b16 %v1103, %v1100
        %v1143 = vpack.c.b16 %v1104, %v1101
        %v1144 = vpack.c.b16 %v1108, %v1105
        %v1145 = vpack.c.b16 %v1109, %v1106
        %v1146 = vpack.c.b16 %v1110, %v1107
        %v1147 = vpack.c.b16 %v1114, %v1111
        %v1148 = vpack.c.b16 %v1115, %v1112
        %v1149 = vpack.c.b16 %v1116, %v1113
        %v1150 = vpack.c.b16 %v1120, %v1117
        %v1151 = vpack.c.b16 %v1121, %v1118
        %v1152 = vpack.c.b16 %v1122, %v1119
        %v1153 = vpack.c.b16 %v1126, %v1123
        %v1154 = vpack.c.b16 %v1127, %v1124
        %v1155 = vpack.c.b16 %v1128, %v1125
        %v1156 = vpack.c.b16 %v1132, %v1129
        %v1157 = vpack.c.b16 %v1133, %v1130
        %v1158 = vpack.c.b16 %v1134, %v1131
        %1183 = vmatpush.bf16.msra.mxu0 %v1156
        %1184 = vmatpush.bf16.msra.mxu0 %v1153
        %1185 = vmatpush.bf16.msra.mxu0 %v1150
        %1186 = vmatpush.bf16.msra.mxu0 %v1147
        %1187 = vmatpush.bf16.msra.mxu0 %v1144
        %1188 = vmatpush.bf16.msra.mxu0 %v1141
        %1189 = vmatpush.bf16.msra.mxu0 %v1138
        %1190 = vmatpush.bf16.msra.mxu0 %v1135
        %1191 = vmatmul.bf16.gmra.mxu0 %v1014
        %v1192 = vpop.f32.mrf.mxu0
        %v1193 = vadd.f32 %v1049, %v1192
        %v1194 = vpop.f32.mrf.mxu0
        %1195 = vdwg.mxu0
        %1196 = vmatpush.bf16.msra.mxu0 %v1157
        %1197 = vmatpush.bf16.msra.mxu0 %v1154
        %1198 = vmatpush.bf16.msra.mxu0 %v1151
        %1199 = vmatpush.bf16.msra.mxu0 %v1148
        %1200 = vmatpush.bf16.msra.mxu0 %v1145
        %1201 = vmatpush.bf16.msra.mxu0 %v1142
        %1202 = vmatpush.bf16.msra.mxu0 %v1139
        %1203 = vmatpush.bf16.msra.mxu0 %v1136
        %1204 = vmatmul.bf16.gmra.mxu0 %v1014
        %v1205 = vpop.f32.mrf.mxu0
        %v1206 = vadd.f32 %v1050, %v1205
        %v1207 = vpop.f32.mrf.mxu0
        %1208 = vdwg.mxu0
        %1209 = vmatpush.bf16.msra.mxu0 %v1158
        %1210 = vmatpush.bf16.msra.mxu0 %v1155
        %1211 = vmatpush.bf16.msra.mxu0 %v1152
        %1212 = vmatpush.bf16.msra.mxu0 %v1149
        %1213 = vmatpush.bf16.msra.mxu0 %v1146
        %1214 = vmatpush.bf16.msra.mxu0 %v1143
        %1215 = vmatpush.bf16.msra.mxu0 %v1140
        %1216 = vmatpush.bf16.msra.mxu0 %v1137
        %1217 = vmatmul.bf16.gmra.mxu0 %v1014
        %v1218 = vpop.f32.mrf.mxu0
        %v1219 = vadd.f32 %v1051, %v1218
        %v1220 = vpop.f32.mrf.mxu0
        %1221 = vdwg.mxu0
        %1223 = vrot.lane.b32.xlu0 %v1193, 96
        %v1224 = vpop.permute.xlu0 %1223
        %1226 = vrot.lane.b32.xlu0 %v1193, 64
        %v1227 = vpop.permute.xlu0 %1226
        %1229 = vrot.lane.b32.xlu0 %v1193, 32
        %v1230 = vpop.permute.xlu0 %1229
        %v1232 = vpack.c.bf16 %v1193, %v1193
        %v1233 = vpack.c.bf16 %v1224, %v1224
        %v1234 = vpack.c.bf16 %v1227, %v1227
        %v1235 = vpack.c.bf16 %v1230, %v1230
        %1237 = vrot.lane.b32.xlu0 %v1206, 96
        %v1238 = vpop.permute.xlu0 %1237
        %1240 = vrot.lane.b32.xlu0 %v1206, 64
        %v1241 = vpop.permute.xlu0 %1240
        %1243 = vrot.lane.b32.xlu0 %v1206, 32
        %v1244 = vpop.permute.xlu0 %1243
        %v1246 = vpack.c.bf16 %v1206, %v1206
        %v1247 = vpack.c.bf16 %v1238, %v1238
        %v1248 = vpack.c.bf16 %v1241, %v1241
        %v1249 = vpack.c.bf16 %v1244, %v1244
        %1251 = vrot.lane.b32.xlu0 %v1219, 96
        %v1252 = vpop.permute.xlu0 %1251
        %1254 = vrot.lane.b32.xlu0 %v1219, 64
        %v1255 = vpop.permute.xlu0 %1254
        %1257 = vrot.lane.b32.xlu0 %v1219, 32
        %v1258 = vpop.permute.xlu0 %1257
        %v1260 = vpack.c.bf16 %v1219, %v1219
        %v1261 = vpack.c.bf16 %v1252, %v1252
        %v1262 = vpack.c.bf16 %v1255, %v1255
        %v1263 = vpack.c.bf16 %v1258, %v1258
        %v1264 = vld [vmem:[%s3] sm:$0xff]
        %vm1265 = vcmask 261120
        %v1267 = vsel %vm1265, %v1232, 0
        %v1270 = vsel %vm1265, %v1246, 0
        %1272 = vmatpush.bf16.xpose.msra.mxu0 0
        %1273 = vmatpush.bf16.xpose.msra.mxu0 0
        %1274 = vmatpush.bf16.xpose.msra.mxu0 0
        %1275 = vmatpush.bf16.xpose.msra.mxu0 0
        %1276 = vmatpush.bf16.xpose.msra.mxu0 0
        %1277 = vmatpush.bf16.xpose.msra.mxu0 0
        %1278 = vmatpush.bf16.xpose.msra.mxu0 0
        %1279 = vmatpush.bf16.xpose.msra.mxu0 %v1270
        %1280 = vmatmul.bf16.gmra.mxu0 %v1267
        %v1281 = vpop.f32.mrf.mxu0
        %v1282 = vadd.f32 %v1264, %v1281
        %v1283 = vpop.f32.mrf.mxu0
        %1284 = vdwg.mxu0
        %v1286 = vsel %vm1265, %v1233, 0
        %v1289 = vsel %vm1265, %v1247, 0
        %1291 = vmatpush.bf16.xpose.msra.mxu0 0
        %1292 = vmatpush.bf16.xpose.msra.mxu0 0
        %1293 = vmatpush.bf16.xpose.msra.mxu0 0
        %1294 = vmatpush.bf16.xpose.msra.mxu0 0
        %1295 = vmatpush.bf16.xpose.msra.mxu0 0
        %1296 = vmatpush.bf16.xpose.msra.mxu0 0
        %1297 = vmatpush.bf16.xpose.msra.mxu0 0
        %1298 = vmatpush.bf16.xpose.msra.mxu0 %v1289
        %1299 = vmatmul.bf16.gmra.mxu0 %v1286
        %v1300 = vpop.f32.mrf.mxu0
        %v1301 = vadd.f32 %v1264, %v1300
        %v1302 = vpop.f32.mrf.mxu0
        %1303 = vdwg.mxu0
        %v1305 = vsel %vm1265, %v1234, 0
        %v1308 = vsel %vm1265, %v1248, 0
        %1310 = vmatpush.bf16.xpose.msra.mxu0 0
        %1311 = vmatpush.bf16.xpose.msra.mxu0 0
        %1312 = vmatpush.bf16.xpose.msra.mxu0 0
        %1313 = vmatpush.bf16.xpose.msra.mxu0 0
        %1314 = vmatpush.bf16.xpose.msra.mxu0 0
        %1315 = vmatpush.bf16.xpose.msra.mxu0 0
        %1316 = vmatpush.bf16.xpose.msra.mxu0 0
        %1317 = vmatpush.bf16.xpose.msra.mxu0 %v1308
        %1318 = vmatmul.bf16.gmra.mxu0 %v1305
        %v1319 = vpop.f32.mrf.mxu0
        %v1320 = vadd.f32 %v1264, %v1319
        %v1321 = vpop.f32.mrf.mxu0
        %1322 = vdwg.mxu0
        %v1324 = vsel %vm1265, %v1235, 0
        %v1327 = vsel %vm1265, %v1249, 0
        %1329 = vmatpush.bf16.xpose.msra.mxu0 0
        %1330 = vmatpush.bf16.xpose.msra.mxu0 0
        %1331 = vmatpush.bf16.xpose.msra.mxu0 0
        %1332 = vmatpush.bf16.xpose.msra.mxu0 0
        %1333 = vmatpush.bf16.xpose.msra.mxu0 0
        %1334 = vmatpush.bf16.xpose.msra.mxu0 0
        %1335 = vmatpush.bf16.xpose.msra.mxu0 0
        %1336 = vmatpush.bf16.xpose.msra.mxu0 %v1327
        %1337 = vmatmul.bf16.gmra.mxu0 %v1324
        %v1338 = vpop.f32.mrf.mxu0
        %v1339 = vadd.f32 %v1264, %v1338
        %v1340 = vpop.f32.mrf.mxu0
        %1341 = vdwg.mxu0
        %vm1342 = vcmask 64512
        %v1343 = vsel %vm1342, %v1282, -inf
        %1344 = vmax.xlane.f32.xlu0 %v1343
        %v1345 = vpop.xlane.xlu0 %1344
        %v1346 = vsel %vm1342, %v1301, -inf
        %1347 = vmax.xlane.f32.xlu0 %v1346
        %v1348 = vpop.xlane.xlu0 %1347
        %v1349 = vsel %vm1342, %v1320, -inf
        %1350 = vmax.xlane.f32.xlu0 %v1349
        %v1351 = vpop.xlane.xlu0 %1350
        %v1352 = vsel %vm1342, %v1339, -inf
        %1353 = vmax.xlane.f32.xlu0 %v1352
        %v1354 = vpop.xlane.xlu0 %1353
        %v1355 = vsub.f32 %v1282, %v1345
        %v1356 = vsub.f32 %v1301, %v1348
        %v1357 = vsub.f32 %v1320, %v1351
        %v1358 = vsub.f32 %v1339, %v1354
        %v1359 = vmul.f32 %v1355, 1.442695
        %v1360 = vpow.pop %v1359
        %v1361 = vmul.f32 %v1356, 1.442695
        %v1362 = vpow.pop %v1361
        %v1363 = vmul.f32 %v1357, 1.442695
        %v1364 = vpow.pop %v1363
        %v1365 = vmul.f32 %v1358, 1.442695
        %v1366 = vpow.pop %v1365
        %v1367 = vsel %vm1342, %v1360, 0.0
        %1368 = vadd.xlane.f32.xlu0 %v1367
        %v1369 = vpop.xlane.xlu0 %1368
        %v1370 = vsel %vm1342, %v1362, 0.0
        %1371 = vadd.xlane.f32.xlu0 %v1370
        %v1372 = vpop.xlane.xlu0 %1371
        %v1373 = vsel %vm1342, %v1364, 0.0
        %1374 = vadd.xlane.f32.xlu0 %v1373
        %v1375 = vpop.xlane.xlu0 %1374
        %v1376 = vsel %vm1342, %v1366, 0.0
        %1377 = vadd.xlane.f32.xlu0 %v1376
        %v1378 = vpop.xlane.xlu0 %1377
        %v1379 = vrcp.pop %v1369
        %v1380 = vrcp.pop %v1372
        %v1381 = vrcp.pop %v1375
        %v1382 = vrcp.pop %v1378
        %v1383 = vmul.f32 %v1360, %v1379
        %v1384 = vmul.f32 %v1362, %v1380
        %v1385 = vmul.f32 %v1364, %v1381
        %v1386 = vmul.f32 %v1366, %v1382
        %v1387 = vpack.c.bf16 %v1383, %v1383
        %v1388 = vpack.c.bf16 %v1384, %v1384
        %v1389 = vpack.c.bf16 %v1385, %v1385
        %v1390 = vpack.c.bf16 %v1386, %v1386
        %v1392 = vsel %vm1342, %v1387, 0
        %vm1394 = vcmask 1043456
        %v1396 = vsel %vm1394, %v1260, 0
        %1398 = vmatpush.bf16.msra.mxu0 0
        %1399 = vmatpush.bf16.msra.mxu0 0
        %1400 = vmatpush.bf16.msra.mxu0 0
        %1401 = vmatpush.bf16.msra.mxu0 0
        %1402 = vmatpush.bf16.msra.mxu0 0
        %1403 = vmatpush.bf16.msra.mxu0 0
        %1404 = vmatpush.bf16.msra.mxu0 0
        %1405 = vmatpush.bf16.msra.mxu0 %v1396
        %1406 = vmatmul.bf16.gmra.mxu0 %v1392
        %v1407 = vpop.f32.mrf.mxu0
        %v1408 = vadd.f32 0.0, %v1407
        %v1409 = vpop.f32.mrf.mxu0
        %1410 = vdwg.mxu0
        %v1412 = vsel %vm1342, %v1388, 0
        %v1415 = vsel %vm1394, %v1261, 0
        %1417 = vmatpush.bf16.msra.mxu0 0
        %1418 = vmatpush.bf16.msra.mxu0 0
        %1419 = vmatpush.bf16.msra.mxu0 0
        %1420 = vmatpush.bf16.msra.mxu0 0
        %1421 = vmatpush.bf16.msra.mxu0 0
        %1422 = vmatpush.bf16.msra.mxu0 0
        %1423 = vmatpush.bf16.msra.mxu0 0
        %1424 = vmatpush.bf16.msra.mxu0 %v1415
        %1425 = vmatmul.bf16.gmra.mxu0 %v1412
        %v1426 = vpop.f32.mrf.mxu0
        %v1427 = vadd.f32 0.0, %v1426
        %v1428 = vpop.f32.mrf.mxu0
        %1429 = vdwg.mxu0
        %v1431 = vsel %vm1342, %v1389, 0
        %v1434 = vsel %vm1394, %v1262, 0
        %1436 = vmatpush.bf16.msra.mxu0 0
        %1437 = vmatpush.bf16.msra.mxu0 0
        %1438 = vmatpush.bf16.msra.mxu0 0
        %1439 = vmatpush.bf16.msra.mxu0 0
        %1440 = vmatpush.bf16.msra.mxu0 0
        %1441 = vmatpush.bf16.msra.mxu0 0
        %1442 = vmatpush.bf16.msra.mxu0 0
        %1443 = vmatpush.bf16.msra.mxu0 %v1434
        %1444 = vmatmul.bf16.gmra.mxu0 %v1431
        %v1445 = vpop.f32.mrf.mxu0
        %v1446 = vadd.f32 0.0, %v1445
        %v1447 = vpop.f32.mrf.mxu0
        %1448 = vdwg.mxu0
        %v1450 = vsel %vm1342, %v1390, 0
        %v1453 = vsel %vm1394, %v1263, 0
        %1455 = vmatpush.bf16.msra.mxu0 0
        %1456 = vmatpush.bf16.msra.mxu0 0
        %1457 = vmatpush.bf16.msra.mxu0 0
        %1458 = vmatpush.bf16.msra.mxu0 0
        %1459 = vmatpush.bf16.msra.mxu0 0
        %1460 = vmatpush.bf16.msra.mxu0 0
        %1461 = vmatpush.bf16.msra.mxu0 0
        %1462 = vmatpush.bf16.msra.mxu0 %v1453
        %1463 = vmatmul.bf16.gmra.mxu0 %v1450
        %v1464 = vpop.f32.mrf.mxu0
        %v1465 = vadd.f32 0.0, %v1464
        %v1466 = vpop.f32.mrf.mxu0
        %1467 = vdwg.mxu0
        %1469 = vrot.lane.b32.xlu0 %v1427, 32
        %v1470 = vpop.permute.xlu0 %1469
        %1473 = vrot.lane.b32.xlu0 %v1446, 64
        %v1474 = vpop.permute.xlu0 %1473
        %1477 = vrot.lane.b32.xlu0 %v1465, 96
        %v1478 = vpop.permute.xlu0 %1477
        %v1480 = vsel %vm1265, %v1408, %v1470
        %vm1481 = vcmask 523264
        %v1482 = vsel %vm1481, %v1480, %v1474
        %vm1483 = vcmask 785408
        %v1484 = vsel %vm1483, %v1482, %v1478
        %v1485 = vpack.c.bf16 %v1484, %v1484
        %v1486 = vld [vmem:[%s784] sm:$0xf]
        %v1487 = vld [vmem:[%s784 + $0x4] sm:$0xf]
        %v1488 = vld [vmem:[%s784 + $0x8] sm:$0xf]
        %v1489 = vld [vmem:[%s784 + $0xc] sm:$0xf]
        %v1490 = vld [vmem:[%s784 + $0x10] sm:$0xf]
        %v1491 = vld [vmem:[%s784 + $0x14] sm:$0xf]
        %v1492 = vld [vmem:[%s784 + $0x18] sm:$0xf]
        %v1493 = vld [vmem:[%s784 + $0x1c] sm:$0xf]
        %v1494 = vld [vmem:[%s784 + $0x20] sm:$0xf]
        %v1495 = vld [vmem:[%s784 + $0x24] sm:$0xf]
        %v1496 = vld [vmem:[%s784 + $0x28] sm:$0xf]
        %v1497 = vld [vmem:[%s784 + $0x2c] sm:$0xf]
        %v1498 = vld [vmem:[%s784 + $0x30] sm:$0xf]
        %v1499 = vld [vmem:[%s784 + $0x34] sm:$0xf]
        %v1500 = vld [vmem:[%s784 + $0x38] sm:$0xf]
        %v1501 = vld [vmem:[%s784 + $0x3c] sm:$0xf]
        %v1502 = vld [vmem:[%s787] sm:$0x1]
        %v1504 = vperm.slane %v1502, 0
        %v1522 = vunpack.c.l.b16 %v1486
        %v1523 = vunpack.c.l.b16 %v1487
        %v1524 = vunpack.c.l.b16 %v1488
        %v1525 = vunpack.c.l.b16 %v1489
        %v1526 = vunpack.c.l.b16 %v1490
        %v1527 = vunpack.c.l.b16 %v1491
        %v1528 = vunpack.c.l.b16 %v1492
        %v1529 = vunpack.c.l.b16 %v1493
        %v1530 = vunpack.c.l.b16 %v1494
        %v1531 = vunpack.c.l.b16 %v1495
        %v1532 = vunpack.c.l.b16 %v1496
        %v1533 = vunpack.c.l.b16 %v1497
        %v1534 = vunpack.c.l.b16 %v1498
        %v1535 = vunpack.c.l.b16 %v1499
        %v1536 = vunpack.c.l.b16 %v1500
        %v1537 = vunpack.c.l.b16 %v1501
        %v1538 = vpack.c.b16 %v1523, %v1522
        %v1539 = vpack.c.b16 %v1525, %v1524
        %v1540 = vpack.c.b16 %v1527, %v1526
        %v1541 = vpack.c.b16 %v1529, %v1528
        %v1542 = vpack.c.b16 %v1531, %v1530
        %v1543 = vpack.c.b16 %v1533, %v1532
        %v1544 = vpack.c.b16 %v1535, %v1534
        %v1545 = vpack.c.b16 %v1537, %v1536
        %1554 = vmatpush.bf16.msra.mxu0 %v1545
        %1555 = vmatpush.bf16.msra.mxu0 %v1544
        %1556 = vmatpush.bf16.msra.mxu0 %v1543
        %1557 = vmatpush.bf16.msra.mxu0 %v1542
        %1558 = vmatpush.bf16.msra.mxu0 %v1541
        %1559 = vmatpush.bf16.msra.mxu0 %v1540
        %1560 = vmatpush.bf16.msra.mxu0 %v1539
        %1561 = vmatpush.bf16.msra.mxu0 %v1538
        %1562 = vmatmul.bf16.gmra.mxu0 %v1485
        %v1563 = vpop.f32.mrf.mxu0
        %v1564 = vadd.f32 %v1504, %v1563
        %v1565 = vpop.f32.mrf.mxu0
        %1566 = vdwg.mxu0
        %v1567 = vadd.f32 %v976, %v1564
        %v1568 = vld [vmem:[%s790] sm:$0x1]
        %v1569 = vld [vmem:[%s793] sm:$0x1]
        %1570 = vadd.xlane.f32.xlu0 %v1567
        %v1571 = vpop.xlane.xlu0 %1570
        %v1572 = vmul.f32 %v1571, %v987
        %v1573 = vsub.f32 %v1567, %v1572
        %v1574 = vmul.f32 %v1573, %v1573
        %1575 = vadd.xlane.f32.xlu0 %v1574
        %v1576 = vpop.xlane.xlu0 %1575
        %v1577 = vmul.f32 %v1576, %v987
        %v1578 = vadd.f32 %v1577, 1e-05
        %v1579 = vrsqrt.pop %v1578
        %v1580 = vmul.f32 %v1579, %v1578
        %v1581 = vmul.f32 %v1580, %v1579
        %v1582 = vmul.f32 0.5, %v1581
        %v1583 = vsub.f32 1.5, %v1582
        %v1584 = vmul.f32 %v1579, %v1583
        %vm1585 = vweird.f32 %v1578
        %vm1586 = vweird.f32 %v1579
        %vm1587 = vmor %vm1585, %vm1586
        %v1588 = vsel %vm1587, %v1579, %v1584
        %v1589 = vmul.f32 %v1573, %v1588
        %v1591 = vperm.slane %v1568, 0
        %v1593 = vmul.f32 %v1589, %v1591
        %v1595 = vperm.slane %v1569, 0
        %v1597 = vadd.f32 %v1593, %v1595
        %v1598 = vpack.c.bf16 %v1597, %v1597
        %v1599 = vld [vmem:[%s798] sm:$0xff]
        %v1600 = vld [vmem:[%s798 + $0x8] sm:$0xff]
        %v1601 = vld [vmem:[%s798 + $0x10] sm:$0xff]
        %v1602 = vld [vmem:[%s798 + $0x18] sm:$0xff]
        %v1603 = vld [vmem:[%s798 + $0x20] sm:$0xff]
        %v1604 = vld [vmem:[%s798 + $0x28] sm:$0xff]
        %v1605 = vld [vmem:[%s798 + $0x30] sm:$0xff]
        %v1606 = vld [vmem:[%s798 + $0x38] sm:$0xff]
        %v1607 = vld [vmem:[%s798 + $0x40] sm:$0xff]
        %v1608 = vld [vmem:[%s798 + $0x48] sm:$0xff]
        %v1609 = vld [vmem:[%s798 + $0x50] sm:$0xff]
        %v1610 = vld [vmem:[%s798 + $0x58] sm:$0xff]
        %v1611 = vld [vmem:[%s798 + $0x60] sm:$0xff]
        %v1612 = vld [vmem:[%s798 + $0x68] sm:$0xff]
        %v1613 = vld [vmem:[%s798 + $0x70] sm:$0xff]
        %v1614 = vld [vmem:[%s798 + $0x78] sm:$0xff]
        %v1615 = vld [vmem:[%s798 + $0x80] sm:$0xff]
        %v1616 = vld [vmem:[%s798 + $0x88] sm:$0xff]
        %v1617 = vld [vmem:[%s798 + $0x90] sm:$0xff]
        %v1618 = vld [vmem:[%s798 + $0x98] sm:$0xff]
        %v1619 = vld [vmem:[%s798 + $0xa0] sm:$0xff]
        %v1620 = vld [vmem:[%s798 + $0xa8] sm:$0xff]
        %v1621 = vld [vmem:[%s798 + $0xb0] sm:$0xff]
        %v1622 = vld [vmem:[%s798 + $0xb8] sm:$0xff]
        %v1623 = vld [vmem:[%s798 + $0xc0] sm:$0xff]
        %v1624 = vld [vmem:[%s798 + $0xc8] sm:$0xff]
        %v1625 = vld [vmem:[%s798 + $0xd0] sm:$0xff]
        %v1626 = vld [vmem:[%s798 + $0xd8] sm:$0xff]
        %v1627 = vld [vmem:[%s798 + $0xe0] sm:$0xff]
        %v1628 = vld [vmem:[%s798 + $0xe8] sm:$0xff]
        %v1629 = vld [vmem:[%s798 + $0xf0] sm:$0xff]
        %v1630 = vld [vmem:[%s798 + $0xf8] sm:$0xff]
        %v1631 = vld [vmem:[%s802] sm:$0xf]
        %v1633 = vperm.slane %v1631, 0
        %v1634 = vperm.slane %v1631, 1
        %v1635 = vperm.slane %v1631, 2
        %v1636 = vperm.slane %v1631, 3
        %v1673 = vunpack.c.l.b16 %v1599
        %v1674 = vunpack.c.h.b16 %v1599
        %v1675 = vunpack.c.l.b16 %v1600
        %v1676 = vunpack.c.h.b16 %v1600
        %v1677 = vunpack.c.l.b16 %v1601
        %v1678 = vunpack.c.h.b16 %v1601
        %v1679 = vunpack.c.l.b16 %v1602
        %v1680 = vunpack.c.h.b16 %v1602
        %v1681 = vunpack.c.l.b16 %v1603
        %v1682 = vunpack.c.h.b16 %v1603
        %v1683 = vunpack.c.l.b16 %v1604
        %v1684 = vunpack.c.h.b16 %v1604
        %v1685 = vunpack.c.l.b16 %v1605
        %v1686 = vunpack.c.h.b16 %v1605
        %v1687 = vunpack.c.l.b16 %v1606
        %v1688 = vunpack.c.h.b16 %v1606
        %v1689 = vunpack.c.l.b16 %v1607
        %v1690 = vunpack.c.h.b16 %v1607
        %v1691 = vunpack.c.l.b16 %v1608
        %v1692 = vunpack.c.h.b16 %v1608
        %v1693 = vunpack.c.l.b16 %v1609
        %v1694 = vunpack.c.h.b16 %v1609
        %v1695 = vunpack.c.l.b16 %v1610
        %v1696 = vunpack.c.h.b16 %v1610
        %v1697 = vunpack.c.l.b16 %v1611
        %v1698 = vunpack.c.h.b16 %v1611
        %v1699 = vunpack.c.l.b16 %v1612
        %v1700 = vunpack.c.h.b16 %v1612
        %v1701 = vunpack.c.l.b16 %v1613
        %v1702 = vunpack.c.h.b16 %v1613
        %v1703 = vunpack.c.l.b16 %v1614
        %v1704 = vunpack.c.h.b16 %v1614
        %v1705 = vunpack.c.l.b16 %v1615
        %v1706 = vunpack.c.h.b16 %v1615
        %v1707 = vunpack.c.l.b16 %v1616
        %v1708 = vunpack.c.h.b16 %v1616
        %v1709 = vunpack.c.l.b16 %v1617
        %v1710 = vunpack.c.h.b16 %v1617
        %v1711 = vunpack.c.l.b16 %v1618
        %v1712 = vunpack.c.h.b16 %v1618
        %v1713 = vunpack.c.l.b16 %v1619
        %v1714 = vunpack.c.h.b16 %v1619
        %v1715 = vunpack.c.l.b16 %v1620
        %v1716 = vunpack.c.h.b16 %v1620
        %v1717 = vunpack.c.l.b16 %v1621
        %v1718 = vunpack.c.h.b16 %v1621
        %v1719 = vunpack.c.l.b16 %v1622
        %v1720 = vunpack.c.h.b16 %v1622
        %v1721 = vunpack.c.l.b16 %v1623
        %v1722 = vunpack.c.h.b16 %v1623
        %v1723 = vunpack.c.l.b16 %v1624
        %v1724 = vunpack.c.h.b16 %v1624
        %v1725 = vunpack.c.l.b16 %v1625
        %v1726 = vunpack.c.h.b16 %v1625
        %v1727 = vunpack.c.l.b16 %v1626
        %v1728 = vunpack.c.h.b16 %v1626
        %v1729 = vunpack.c.l.b16 %v1627
        %v1730 = vunpack.c.h.b16 %v1627
        %v1731 = vunpack.c.l.b16 %v1628
        %v1732 = vunpack.c.h.b16 %v1628
        %v1733 = vunpack.c.l.b16 %v1629
        %v1734 = vunpack.c.h.b16 %v1629
        %v1735 = vunpack.c.l.b16 %v1630
        %v1736 = vunpack.c.h.b16 %v1630
        %v1737 = vpack.c.b16 %v1677, %v1673
        %v1738 = vpack.c.b16 %v1678, %v1674
        %v1739 = vpack.c.b16 %v1679, %v1675
        %v1740 = vpack.c.b16 %v1680, %v1676
        %v1741 = vpack.c.b16 %v1685, %v1681
        %v1742 = vpack.c.b16 %v1686, %v1682
        %v1743 = vpack.c.b16 %v1687, %v1683
        %v1744 = vpack.c.b16 %v1688, %v1684
        %v1745 = vpack.c.b16 %v1693, %v1689
        %v1746 = vpack.c.b16 %v1694, %v1690
        %v1747 = vpack.c.b16 %v1695, %v1691
        %v1748 = vpack.c.b16 %v1696, %v1692
        %v1749 = vpack.c.b16 %v1701, %v1697
        %v1750 = vpack.c.b16 %v1702, %v1698
        %v1751 = vpack.c.b16 %v1703, %v1699
        %v1752 = vpack.c.b16 %v1704, %v1700
        %v1753 = vpack.c.b16 %v1709, %v1705
        %v1754 = vpack.c.b16 %v1710, %v1706
        %v1755 = vpack.c.b16 %v1711, %v1707
        %v1756 = vpack.c.b16 %v1712, %v1708
        %v1757 = vpack.c.b16 %v1717, %v1713
        %v1758 = vpack.c.b16 %v1718, %v1714
        %v1759 = vpack.c.b16 %v1719, %v1715
        %v1760 = vpack.c.b16 %v1720, %v1716
        %v1761 = vpack.c.b16 %v1725, %v1721
        %v1762 = vpack.c.b16 %v1726, %v1722
        %v1763 = vpack.c.b16 %v1727, %v1723
        %v1764 = vpack.c.b16 %v1728, %v1724
        %v1765 = vpack.c.b16 %v1733, %v1729
        %v1766 = vpack.c.b16 %v1734, %v1730
        %v1767 = vpack.c.b16 %v1735, %v1731
        %v1768 = vpack.c.b16 %v1736, %v1732
        %1801 = vmatpush.bf16.msra.mxu0 %v1765
        %1802 = vmatpush.bf16.msra.mxu0 %v1761
        %1803 = vmatpush.bf16.msra.mxu0 %v1757
        %1804 = vmatpush.bf16.msra.mxu0 %v1753
        %1805 = vmatpush.bf16.msra.mxu0 %v1749
        %1806 = vmatpush.bf16.msra.mxu0 %v1745
        %1807 = vmatpush.bf16.msra.mxu0 %v1741
        %1808 = vmatpush.bf16.msra.mxu0 %v1737
        %1809 = vmatmul.bf16.gmra.mxu0 %v1598
        %v1810 = vpop.f32.mrf.mxu0
        %v1811 = vadd.f32 %v1633, %v1810
        %v1812 = vpop.f32.mrf.mxu0
        %1813 = vdwg.mxu0
        %1814 = vmatpush.bf16.msra.mxu0 %v1766
        %1815 = vmatpush.bf16.msra.mxu0 %v1762
        %1816 = vmatpush.bf16.msra.mxu0 %v1758
        %1817 = vmatpush.bf16.msra.mxu0 %v1754
        %1818 = vmatpush.bf16.msra.mxu0 %v1750
        %1819 = vmatpush.bf16.msra.mxu0 %v1746
        %1820 = vmatpush.bf16.msra.mxu0 %v1742
        %1821 = vmatpush.bf16.msra.mxu0 %v1738
        %1822 = vmatmul.bf16.gmra.mxu0 %v1598
        %v1823 = vpop.f32.mrf.mxu0
        %v1824 = vadd.f32 %v1634, %v1823
        %v1825 = vpop.f32.mrf.mxu0
        %1826 = vdwg.mxu0
        %1827 = vmatpush.bf16.msra.mxu0 %v1767
        %1828 = vmatpush.bf16.msra.mxu0 %v1763
        %1829 = vmatpush.bf16.msra.mxu0 %v1759
        %1830 = vmatpush.bf16.msra.mxu0 %v1755
        %1831 = vmatpush.bf16.msra.mxu0 %v1751
        %1832 = vmatpush.bf16.msra.mxu0 %v1747
        %1833 = vmatpush.bf16.msra.mxu0 %v1743
        %1834 = vmatpush.bf16.msra.mxu0 %v1739
        %1835 = vmatmul.bf16.gmra.mxu0 %v1598
        %v1836 = vpop.f32.mrf.mxu0
        %v1837 = vadd.f32 %v1635, %v1836
        %v1838 = vpop.f32.mrf.mxu0
        %1839 = vdwg.mxu0
        %1840 = vmatpush.bf16.msra.mxu0 %v1768
        %1841 = vmatpush.bf16.msra.mxu0 %v1764
        %1842 = vmatpush.bf16.msra.mxu0 %v1760
        %1843 = vmatpush.bf16.msra.mxu0 %v1756
        %1844 = vmatpush.bf16.msra.mxu0 %v1752
        %1845 = vmatpush.bf16.msra.mxu0 %v1748
        %1846 = vmatpush.bf16.msra.mxu0 %v1744
        %1847 = vmatpush.bf16.msra.mxu0 %v1740
        %1848 = vmatmul.bf16.gmra.mxu0 %v1598
        %v1849 = vpop.f32.mrf.mxu0
        %v1850 = vadd.f32 %v1636, %v1849
        %v1851 = vpop.f32.mrf.mxu0
        %1852 = vdwg.mxu0
        %v1853 = vmul.f32 %v1811, %v1811
        %v1854 = vmul.f32 %v1824, %v1824
        %v1855 = vmul.f32 %v1837, %v1837
        %v1856 = vmul.f32 %v1850, %v1850
        %v1857 = vmul.f32 %v1811, %v1853
        %v1858 = vmul.f32 %v1824, %v1854
        %v1859 = vmul.f32 %v1837, %v1855
        %v1860 = vmul.f32 %v1850, %v1856
        %v1861 = vmul.f32 %v1857, 0.044715
        %v1862 = vmul.f32 %v1858, 0.044715
        %v1863 = vmul.f32 %v1859, 0.044715
        %v1864 = vmul.f32 %v1860, 0.044715
        %v1865 = vadd.f32 %v1811, %v1861
        %v1866 = vadd.f32 %v1824, %v1862
        %v1867 = vadd.f32 %v1837, %v1863
        %v1868 = vadd.f32 %v1850, %v1864
        %v1869 = vmul.f32 %v1865, 0.7978846
        %v1870 = vmul.f32 %v1866, 0.7978846
        %v1871 = vmul.f32 %v1867, 0.7978846
        %v1872 = vmul.f32 %v1868, 0.7978846
        %v1873 = vtanh.pop %v1869
        %v1874 = vtanh.pop %v1870
        %v1875 = vtanh.pop %v1871
        %v1876 = vtanh.pop %v1872
        %v1877 = vadd.f32 %v1873, 1.0
        %v1878 = vadd.f32 %v1874, 1.0
        %v1879 = vadd.f32 %v1875, 1.0
        %v1880 = vadd.f32 %v1876, 1.0
        %v1881 = vmul.f32 %v1877, 0.5
        %v1882 = vmul.f32 %v1878, 0.5
        %v1883 = vmul.f32 %v1879, 0.5
        %v1884 = vmul.f32 %v1880, 0.5
        %v1885 = vmul.f32 %v1811, %v1881
        %v1886 = vmul.f32 %v1824, %v1882
        %v1887 = vmul.f32 %v1837, %v1883
        %v1888 = vmul.f32 %v1850, %v1884
        %v1889 = vpack.c.bf16 %v1885, %v1885
        %v1890 = vpack.c.bf16 %v1886, %v1886
        %v1891 = vpack.c.bf16 %v1887, %v1887
        %v1892 = vpack.c.bf16 %v1888, %v1888
        %v1893 = vld [vmem:[%s807] sm:$0xf]
        %v1894 = vld [vmem:[%s807 + $0x4] sm:$0xf]
        %v1895 = vld [vmem:[%s807 + $0x8] sm:$0xf]
        %v1896 = vld [vmem:[%s807 + $0xc] sm:$0xf]
        %v1897 = vld [vmem:[%s807 + $0x10] sm:$0xf]
        %v1898 = vld [vmem:[%s807 + $0x14] sm:$0xf]
        %v1899 = vld [vmem:[%s807 + $0x18] sm:$0xf]
        %v1900 = vld [vmem:[%s807 + $0x1c] sm:$0xf]
        %v1901 = vld [vmem:[%s807 + $0x20] sm:$0xf]
        %v1902 = vld [vmem:[%s807 + $0x24] sm:$0xf]
        %v1903 = vld [vmem:[%s807 + $0x28] sm:$0xf]
        %v1904 = vld [vmem:[%s807 + $0x2c] sm:$0xf]
        %v1905 = vld [vmem:[%s807 + $0x30] sm:$0xf]
        %v1906 = vld [vmem:[%s807 + $0x34] sm:$0xf]
        %v1907 = vld [vmem:[%s807 + $0x38] sm:$0xf]
        %v1908 = vld [vmem:[%s807 + $0x3c] sm:$0xf]
        %v1909 = vld [vmem:[%s807 + $0x40] sm:$0xf]
        %v1910 = vld [vmem:[%s807 + $0x44] sm:$0xf]
        %v1911 = vld [vmem:[%s807 + $0x48] sm:$0xf]
        %v1912 = vld [vmem:[%s807 + $0x4c] sm:$0xf]
        %v1913 = vld [vmem:[%s807 + $0x50] sm:$0xf]
        %v1914 = vld [vmem:[%s807 + $0x54] sm:$0xf]
        %v1915 = vld [vmem:[%s807 + $0x58] sm:$0xf]
        %v1916 = vld [vmem:[%s807 + $0x5c] sm:$0xf]
        %v1917 = vld [vmem:[%s807 + $0x60] sm:$0xf]
        %v1918 = vld [vmem:[%s807 + $0x64] sm:$0xf]
        %v1919 = vld [vmem:[%s807 + $0x68] sm:$0xf]
        %v1920 = vld [vmem:[%s807 + $0x6c] sm:$0xf]
        %v1921 = vld [vmem:[%s807 + $0x70] sm:$0xf]
        %v1922 = vld [vmem:[%s807 + $0x74] sm:$0xf]
        %v1923 = vld [vmem:[%s807 + $0x78] sm:$0xf]
        %v1924 = vld [vmem:[%s807 + $0x7c] sm:$0xf]
        %v1925 = vld [vmem:[%s807 + $0x80] sm:$0xf]
        %v1926 = vld [vmem:[%s807 + $0x84] sm:$0xf]
        %v1927 = vld [vmem:[%s807 + $0x88] sm:$0xf]
        %v1928 = vld [vmem:[%s807 + $0x8c] sm:$0xf]
        %v1929 = vld [vmem:[%s807 + $0x90] sm:$0xf]
        %v1930 = vld [vmem:[%s807 + $0x94] sm:$0xf]
        %v1931 = vld [vmem:[%s807 + $0x98] sm:$0xf]
        %v1932 = vld [vmem:[%s807 + $0x9c] sm:$0xf]
        %v1933 = vld [vmem:[%s807 + $0xa0] sm:$0xf]
        %v1934 = vld [vmem:[%s807 + $0xa4] sm:$0xf]
        %v1935 = vld [vmem:[%s807 + $0xa8] sm:$0xf]
        %v1936 = vld [vmem:[%s807 + $0xac] sm:$0xf]
        %v1937 = vld [vmem:[%s807 + $0xb0] sm:$0xf]
        %v1938 = vld [vmem:[%s807 + $0xb4] sm:$0xf]
        %v1939 = vld [vmem:[%s807 + $0xb8] sm:$0xf]
        %v1940 = vld [vmem:[%s807 + $0xbc] sm:$0xf]
        %v1941 = vld [vmem:[%s807 + $0xc0] sm:$0xf]
        %v1942 = vld [vmem:[%s807 + $0xc4] sm:$0xf]
        %v1943 = vld [vmem:[%s807 + $0xc8] sm:$0xf]
        %v1944 = vld [vmem:[%s807 + $0xcc] sm:$0xf]
        %v1945 = vld [vmem:[%s807 + $0xd0] sm:$0xf]
        %v1946 = vld [vmem:[%s807 + $0xd4] sm:$0xf]
        %v1947 = vld [vmem:[%s807 + $0xd8] sm:$0xf]
        %v1948 = vld [vmem:[%s807 + $0xdc] sm:$0xf]
        %v1949 = vld [vmem:[%s807 + $0xe0] sm:$0xf]
        %v1950 = vld [vmem:[%s807 + $0xe4] sm:$0xf]
        %v1951 = vld [vmem:[%s807 + $0xe8] sm:$0xf]
        %v1952 = vld [vmem:[%s807 + $0xec] sm:$0xf]
        %v1953 = vld [vmem:[%s807 + $0xf0] sm:$0xf]
        %v1954 = vld [vmem:[%s807 + $0xf4] sm:$0xf]
        %v1955 = vld [vmem:[%s807 + $0xf8] sm:$0xf]
        %v1956 = vld [vmem:[%s807 + $0xfc] sm:$0xf]
        %v1957 = vld [vmem:[%s810] sm:$0x1]
        %v1959 = vperm.slane %v1957, 0
        %v2025 = vunpack.c.l.b16 %v1893
        %v2026 = vunpack.c.l.b16 %v1894
        %v2027 = vunpack.c.l.b16 %v1895
        %v2028 = vunpack.c.l.b16 %v1896
        %v2029 = vunpack.c.l.b16 %v1897
        %v2030 = vunpack.c.l.b16 %v1898
        %v2031 = vunpack.c.l.b16 %v1899
        %v2032 = vunpack.c.l.b16 %v1900
        %v2033 = vunpack.c.l.b16 %v1901
        %v2034 = vunpack.c.l.b16 %v1902
        %v2035 = vunpack.c.l.b16 %v1903
        %v2036 = vunpack.c.l.b16 %v1904
        %v2037 = vunpack.c.l.b16 %v1905
        %v2038 = vunpack.c.l.b16 %v1906
        %v2039 = vunpack.c.l.b16 %v1907
        %v2040 = vunpack.c.l.b16 %v1908
        %v2041 = vunpack.c.l.b16 %v1909
        %v2042 = vunpack.c.l.b16 %v1910
        %v2043 = vunpack.c.l.b16 %v1911
        %v2044 = vunpack.c.l.b16 %v1912
        %v2045 = vunpack.c.l.b16 %v1913
        %v2046 = vunpack.c.l.b16 %v1914
        %v2047 = vunpack.c.l.b16 %v1915
        %v2048 = vunpack.c.l.b16 %v1916
        %v2049 = vunpack.c.l.b16 %v1917
        %v2050 = vunpack.c.l.b16 %v1918
        %v2051 = vunpack.c.l.b16 %v1919
        %v2052 = vunpack.c.l.b16 %v1920
        %v2053 = vunpack.c.l.b16 %v1921
        %v2054 = vunpack.c.l.b16 %v1922
        %v2055 = vunpack.c.l.b16 %v1923
        %v2056 = vunpack.c.l.b16 %v1924
        %v2057 = vunpack.c.l.b16 %v1925
        %v2058 = vunpack.c.l.b16 %v1926
        %v2059 = vunpack.c.l.b16 %v1927
        %v2060 = vunpack.c.l.b16 %v1928
        %v2061 = vunpack.c.l.b16 %v1929
        %v2062 = vunpack.c.l.b16 %v1930
        %v2063 = vunpack.c.l.b16 %v1931
        %v2064 = vunpack.c.l.b16 %v1932
        %v2065 = vunpack.c.l.b16 %v1933
        %v2066 = vunpack.c.l.b16 %v1934
        %v2067 = vunpack.c.l.b16 %v1935
        %v2068 = vunpack.c.l.b16 %v1936
        %v2069 = vunpack.c.l.b16 %v1937
        %v2070 = vunpack.c.l.b16 %v1938
        %v2071 = vunpack.c.l.b16 %v1939
        %v2072 = vunpack.c.l.b16 %v1940
        %v2073 = vunpack.c.l.b16 %v1941
        %v2074 = vunpack.c.l.b16 %v1942
        %v2075 = vunpack.c.l.b16 %v1943
        %v2076 = vunpack.c.l.b16 %v1944
        %v2077 = vunpack.c.l.b16 %v1945
        %v2078 = vunpack.c.l.b16 %v1946
        %v2079 = vunpack.c.l.b16 %v1947
        %v2080 = vunpack.c.l.b16 %v1948
        %v2081 = vunpack.c.l.b16 %v1949
        %v2082 = vunpack.c.l.b16 %v1950
        %v2083 = vunpack.c.l.b16 %v1951
        %v2084 = vunpack.c.l.b16 %v1952
        %v2085 = vunpack.c.l.b16 %v1953
        %v2086 = vunpack.c.l.b16 %v1954
        %v2087 = vunpack.c.l.b16 %v1955
        %v2088 = vunpack.c.l.b16 %v1956
        %v2089 = vpack.c.b16 %v2026, %v2025
        %v2090 = vpack.c.b16 %v2028, %v2027
        %v2091 = vpack.c.b16 %v2030, %v2029
        %v2092 = vpack.c.b16 %v2032, %v2031
        %v2093 = vpack.c.b16 %v2034, %v2033
        %v2094 = vpack.c.b16 %v2036, %v2035
        %v2095 = vpack.c.b16 %v2038, %v2037
        %v2096 = vpack.c.b16 %v2040, %v2039
        %v2097 = vpack.c.b16 %v2042, %v2041
        %v2098 = vpack.c.b16 %v2044, %v2043
        %v2099 = vpack.c.b16 %v2046, %v2045
        %v2100 = vpack.c.b16 %v2048, %v2047
        %v2101 = vpack.c.b16 %v2050, %v2049
        %v2102 = vpack.c.b16 %v2052, %v2051
        %v2103 = vpack.c.b16 %v2054, %v2053
        %v2104 = vpack.c.b16 %v2056, %v2055
        %v2105 = vpack.c.b16 %v2058, %v2057
        %v2106 = vpack.c.b16 %v2060, %v2059
        %v2107 = vpack.c.b16 %v2062, %v2061
        %v2108 = vpack.c.b16 %v2064, %v2063
        %v2109 = vpack.c.b16 %v2066, %v2065
        %v2110 = vpack.c.b16 %v2068, %v2067
        %v2111 = vpack.c.b16 %v2070, %v2069
        %v2112 = vpack.c.b16 %v2072, %v2071
        %v2113 = vpack.c.b16 %v2074, %v2073
        %v2114 = vpack.c.b16 %v2076, %v2075
        %v2115 = vpack.c.b16 %v2078, %v2077
        %v2116 = vpack.c.b16 %v2080, %v2079
        %v2117 = vpack.c.b16 %v2082, %v2081
        %v2118 = vpack.c.b16 %v2084, %v2083
        %v2119 = vpack.c.b16 %v2086, %v2085
        %v2120 = vpack.c.b16 %v2088, %v2087
        %2153 = vmatpush.bf16.msra.mxu0 %v2096
        %2154 = vmatpush.bf16.msra.mxu0 %v2095
        %2155 = vmatpush.bf16.msra.mxu0 %v2094
        %2156 = vmatpush.bf16.msra.mxu0 %v2093
        %2157 = vmatpush.bf16.msra.mxu0 %v2092
        %2158 = vmatpush.bf16.msra.mxu0 %v2091
        %2159 = vmatpush.bf16.msra.mxu0 %v2090
        %2160 = vmatpush.bf16.msra.mxu0 %v2089
        %2161 = vmatmul.bf16.gmra.mxu0 %v1889
        %v2162 = vpop.f32.mrf.mxu0
        %v2163 = vadd.f32 %v1959, %v2162
        %v2164 = vpop.f32.mrf.mxu0
        %2165 = vdwg.mxu0
        %2166 = vmatpush.bf16.msra.mxu0 %v2104
        %2167 = vmatpush.bf16.msra.mxu0 %v2103
        %2168 = vmatpush.bf16.msra.mxu0 %v2102
        %2169 = vmatpush.bf16.msra.mxu0 %v2101
        %2170 = vmatpush.bf16.msra.mxu0 %v2100
        %2171 = vmatpush.bf16.msra.mxu0 %v2099
        %2172 = vmatpush.bf16.msra.mxu0 %v2098
        %2173 = vmatpush.bf16.msra.mxu0 %v2097
        %2174 = vmatmul.bf16.gmra.mxu0 %v1890
        %v2175 = vpop.f32.mrf.mxu0
        %v2176 = vadd.f32 %v2163, %v2175
        %v2177 = vpop.f32.mrf.mxu0
        %2178 = vdwg.mxu0
        %2179 = vmatpush.bf16.msra.mxu0 %v2112
        %2180 = vmatpush.bf16.msra.mxu0 %v2111
        %2181 = vmatpush.bf16.msra.mxu0 %v2110
        %2182 = vmatpush.bf16.msra.mxu0 %v2109
        %2183 = vmatpush.bf16.msra.mxu0 %v2108
        %2184 = vmatpush.bf16.msra.mxu0 %v2107
        %2185 = vmatpush.bf16.msra.mxu0 %v2106
        %2186 = vmatpush.bf16.msra.mxu0 %v2105
        %2187 = vmatmul.bf16.gmra.mxu0 %v1891
        %v2188 = vpop.f32.mrf.mxu0
        %v2189 = vadd.f32 %v2176, %v2188
        %v2190 = vpop.f32.mrf.mxu0
        %2191 = vdwg.mxu0
        %2192 = vmatpush.bf16.msra.mxu0 %v2120
        %2193 = vmatpush.bf16.msra.mxu0 %v2119
        %2194 = vmatpush.bf16.msra.mxu0 %v2118
        %2195 = vmatpush.bf16.msra.mxu0 %v2117
        %2196 = vmatpush.bf16.msra.mxu0 %v2116
        %2197 = vmatpush.bf16.msra.mxu0 %v2115
        %2198 = vmatpush.bf16.msra.mxu0 %v2114
        %2199 = vmatpush.bf16.msra.mxu0 %v2113
        %2200 = vmatmul.bf16.gmra.mxu0 %v1892
        %v2201 = vpop.f32.mrf.mxu0
        %v2202 = vadd.f32 %v2189, %v2201
        %v2203 = vpop.f32.mrf.mxu0
        %2204 = vdwg.mxu0
        %v2205 = vadd.f32 %v1567, %v2202
        %2206 = vst [vmem:[#allocation2] sm:$0xff] %v2205
        %p2207 = scmp.eq.s32.totalorder %s38, 1
        // Predicated region
        $region101: #{idea_predictor_forward.1} parent=95 // pred_check
          %p2208 = pneg %p2207
        $region102: #{idea_predictor_forward.1} parent=95 // pred_check_branch
          %2210 = sbr.rel (%p2208) target = $region104
        $region103: #{idea_predictor_forward.1} parent=95 // pred_region
          %v2211 = vld [vmem:[#allocation2] sm:$0xff]
          %v2212 = vld [vmem:[%s16] sm:$0x1]
          %v2213 = vld [vmem:[%s17] sm:$0x1]
          %2214 = vadd.xlane.f32.xlu0 %v2211
          %v2215 = vpop.xlane.xlu0 %2214
          %v2216 = vmul.f32 %v2215, %v987
          %v2217 = vsub.f32 %v2211, %v2216
          %v2218 = vmul.f32 %v2217, %v2217
          %2219 = vadd.xlane.f32.xlu0 %v2218
          %v2220 = vpop.xlane.xlu0 %2219
          %v2221 = vmul.f32 %v2220, %v987
          %v2222 = vadd.f32 %v2221, 1e-05
          %v2223 = vrsqrt.pop %v2222
          %v2224 = vmul.f32 %v2223, %v2222
          %v2225 = vmul.f32 %v2224, %v2223
          %v2226 = vmul.f32 0.5, %v2225
          %v2227 = vsub.f32 1.5, %v2226
          %v2228 = vmul.f32 %v2223, %v2227
          %vm2229 = vweird.f32 %v2222
          %vm2230 = vweird.f32 %v2223
          %vm2231 = vmor %vm2229, %vm2230
          %v2232 = vsel %vm2231, %v2223, %v2228
          %v2233 = vmul.f32 %v2217, %v2232
          %v2235 = vperm.slane %v2212, 0
          %v2237 = vmul.f32 %v2233, %v2235
          %v2239 = vperm.slane %v2213, 0
          %v2241 = vadd.f32 %v2237, %v2239
          %v2242 = vpack.c.bf16 %v2241, %v2241
          %v2243 = vld [vmem:[%s18] sm:$0xff]
          %v2244 = vld [vmem:[%s18 + $0x8] sm:$0xff]
          %v2245 = vld [vmem:[%s18 + $0x10] sm:$0xff]
          %v2246 = vld [vmem:[%s18 + $0x18] sm:$0xff]
          %v2247 = vld [vmem:[%s18 + $0x20] sm:$0xff]
          %v2248 = vld [vmem:[%s18 + $0x28] sm:$0xff]
          %v2249 = vld [vmem:[%s18 + $0x30] sm:$0xff]
          %v2250 = vld [vmem:[%s18 + $0x38] sm:$0xff]
          %v2251 = vld [vmem:[%s18 + $0x40] sm:$0xff]
          %v2252 = vld [vmem:[%s18 + $0x48] sm:$0xff]
          %v2253 = vld [vmem:[%s18 + $0x50] sm:$0xff]
          %v2254 = vld [vmem:[%s18 + $0x58] sm:$0xff]
          %v2255 = vld [vmem:[%s18 + $0x60] sm:$0xff]
          %v2256 = vld [vmem:[%s18 + $0x68] sm:$0xff]
          %v2257 = vld [vmem:[%s18 + $0x70] sm:$0xff]
          %v2258 = vld [vmem:[%s18 + $0x78] sm:$0xff]
          %v2275 = vunpack.c.l.b16 %v2243
          %v2276 = vunpack.c.h.b16 %v2243
          %v2277 = vunpack.c.l.b16 %v2244
          %v2278 = vunpack.c.h.b16 %v2244
          %v2279 = vunpack.c.l.b16 %v2245
          %v2280 = vunpack.c.h.b16 %v2245
          %v2281 = vunpack.c.l.b16 %v2246
          %v2282 = vunpack.c.h.b16 %v2246
          %v2283 = vunpack.c.l.b16 %v2247
          %v2284 = vunpack.c.h.b16 %v2247
          %v2285 = vunpack.c.l.b16 %v2248
          %v2286 = vunpack.c.h.b16 %v2248
          %v2287 = vunpack.c.l.b16 %v2249
          %v2288 = vunpack.c.h.b16 %v2249
          %v2289 = vunpack.c.l.b16 %v2250
          %v2290 = vunpack.c.h.b16 %v2250
          %v2291 = vunpack.c.l.b16 %v2251
          %v2292 = vunpack.c.h.b16 %v2251
          %v2293 = vunpack.c.l.b16 %v2252
          %v2294 = vunpack.c.h.b16 %v2252
          %v2295 = vunpack.c.l.b16 %v2253
          %v2296 = vunpack.c.h.b16 %v2253
          %v2297 = vunpack.c.l.b16 %v2254
          %v2298 = vunpack.c.h.b16 %v2254
          %v2299 = vunpack.c.l.b16 %v2255
          %v2300 = vunpack.c.h.b16 %v2255
          %v2301 = vunpack.c.l.b16 %v2256
          %v2302 = vunpack.c.h.b16 %v2256
          %v2303 = vunpack.c.l.b16 %v2257
          %v2304 = vunpack.c.h.b16 %v2257
          %v2305 = vunpack.c.l.b16 %v2258
          %v2306 = vunpack.c.h.b16 %v2258
          %v2307 = vpack.c.b16 %v2277, %v2275
          %v2308 = vpack.c.b16 %v2278, %v2276
          %v2309 = vpack.c.b16 %v2281, %v2279
          %v2310 = vpack.c.b16 %v2282, %v2280
          %v2311 = vpack.c.b16 %v2285, %v2283
          %v2312 = vpack.c.b16 %v2286, %v2284
          %v2313 = vpack.c.b16 %v2289, %v2287
          %v2314 = vpack.c.b16 %v2290, %v2288
          %v2315 = vpack.c.b16 %v2293, %v2291
          %v2316 = vpack.c.b16 %v2294, %v2292
          %v2317 = vpack.c.b16 %v2297, %v2295
          %v2318 = vpack.c.b16 %v2298, %v2296
          %v2319 = vpack.c.b16 %v2301, %v2299
          %v2320 = vpack.c.b16 %v2302, %v2300
          %v2321 = vpack.c.b16 %v2305, %v2303
          %v2322 = vpack.c.b16 %v2306, %v2304
          %2339 = vmatpush.bf16.msra.mxu0 %v2321
          %2340 = vmatpush.bf16.msra.mxu0 %v2319
          %2341 = vmatpush.bf16.msra.mxu0 %v2317
          %2342 = vmatpush.bf16.msra.mxu0 %v2315
          %2343 = vmatpush.bf16.msra.mxu0 %v2313
          %2344 = vmatpush.bf16.msra.mxu0 %v2311
          %2345 = vmatpush.bf16.msra.mxu0 %v2309
          %2346 = vmatpush.bf16.msra.mxu0 %v2307
          %2347 = vmatmul.bf16.gmra.mxu0 %v2242
          %v2348 = vpop.f32.mrf.mxu0
          %v2349 = vadd.f32 0.0, %v2348
          %v2350 = vpop.f32.mrf.mxu0
          %2351 = vdwg.mxu0
          %2352 = vmatpush.bf16.msra.mxu0 %v2322
          %2353 = vmatpush.bf16.msra.mxu0 %v2320
          %2354 = vmatpush.bf16.msra.mxu0 %v2318
          %2355 = vmatpush.bf16.msra.mxu0 %v2316
          %2356 = vmatpush.bf16.msra.mxu0 %v2314
          %2357 = vmatpush.bf16.msra.mxu0 %v2312
          %2358 = vmatpush.bf16.msra.mxu0 %v2310
          %2359 = vmatpush.bf16.msra.mxu0 %v2308
          %2360 = vmatmul.bf16.gmra.mxu0 %v2242
          %v2361 = vpop.f32.mrf.mxu0
          %v2362 = vadd.f32 0.0, %v2361
          %v2363 = vpop.f32.mrf.mxu0
          %2364 = vdwg.mxu0
          %2365 = vst [vmem:[%s759] sm:$0xff] %v2349
          %2366 = vst [vmem:[%s759 + $0x8] sm:$0xff] %v2362
        $region104: #{idea_predictor_forward.1} parent=95 // pred_fallthru
          _
        %s2367 = sand.u32 %s517, 1
        %s2368 = scalar_lea.sflag [#allocation4], %s2367
        %s2369 = sand.u32 %s517, 1
        %s2370 = smul.addr %s2369, 16
        %s2371 = scalar_lea.vmem [#allocation3], %s2370
        // Predicated region
        $region105: #{idea_predictor_forward.1} parent=95 // pred_check
          %p2372 = pneg %p527
        $region106: #{idea_predictor_forward.1} parent=95 // pred_check_branch
          %2374 = sbr.rel (%p2372) target = $region108
        $region107: #{idea_predictor_forward.1} parent=95 // pred_region
          %2376 = vsyncadd %s2368, 0
          %s2377 = smul.addr %s37, 2
          %s2378 = smul.addr %s2377, 8
          %s2379 = scalar_lea.hbm %s19, %s2378
          %s2381 = sshll.u32 %s2371, 4
          %s2382 = int_to_ptr.vmem [resolvable:$true] %s2381
          %s2383 = sshll.u32 %s2379, 4
          %s2384 = int_to_ptr.hbm [resolvable:$true] %s2383
          %2386 = dma.vmem_to_hbm [thread:$0]  %s2382, 256, %s2384, %s2368
        $region108: #{idea_predictor_forward.1} parent=95 // pred_fallthru
          _
      $region96: #{idea_predictor_forward.1} parent=5 // pred_fallthru
        _
      %p2387 = scmp.le.s32.totalorder 2, %s28
      // Predicated region
      $region109: #{idea_predictor_forward.1} parent=5 // pred_check
        %p2388 = pneg %p2387
      $region110: #{idea_predictor_forward.1} parent=5 // pred_check_branch
        %2390 = sbr.rel (%p2388) target = $region112
      $region111: #{idea_predictor_forward.1} parent=5 // pred_region
        %s2391 = ssub.s32 %s28, 2
        // Predicated region
        $region113: #{idea_predictor_forward.1} parent=111 // pred_check
          %p2392 = pneg %p533
        $region114: #{idea_predictor_forward.1} parent=111 // pred_check_branch
          %2394 = sbr.rel (%p2392) target = $region116
        $region115: #{idea_predictor_forward.1} parent=111 // pred_region
          %s2395 = sand.u32 %s518, 1
          %s2396 = scalar_lea.sflag [#allocation4], %s2395
          %s2397 = sand.u32 %s518, 1
          %s2398 = smul.addr %s2397, 16
          %s2399 = scalar_lea.vmem [#allocation3], %s2398
          %2401 = dma.done %s2396, 256
        $region116: #{idea_predictor_forward.1} parent=111 // pred_fallthru
          _
      $region112: #{idea_predictor_forward.1} parent=5 // pred_fallthru
        _
    $region6: #{idea_predictor_forward.1} parent=1 // loop_footer
      %s32 = sadd.s32 1, %s28
    $region7: #{idea_predictor_forward.1} parent=1 // loop_footer_branch
      %27 = sbr.rel target = $region3
    $region8: #{idea_predictor_forward.1} parent=1 // loop_exit
      _
    %2402 = vsyncpa [#allocation4], 1
    %s2403 = scalar_lea.sflag [#allocation4], 1
    %2404 = vsyncpa %s2403, 1

</llo_original>
